<compile_context>
chip_gen: v5e
topology: v5e:2x2
jax: 0.10.0
libtpu: 0.0.40
codegen_flags: <defaults>
</compile_context>

<pallas_src>
import jax
import jax.numpy as jnp
from jax.experimental import pallas as pl
from jax.experimental.pallas import tpu as pltpu

LANE = 128


# ----------------------------------------------------------------------------
# Kernel: one (batch tile x Tq tile) per grid step, online softmax over Tq.
# ----------------------------------------------------------------------------
def _bilinear_attn_kernel(hq_ref, hp_ref, wt_ref, b_ref, out_ref,
                          m_sc, l_sc, acc_sc):
    tb, tkq, qp = hq_ref.shape
    _, tp, pp = hp_ref.shape
    mm_dtype = hq_ref.dtype                     # MXU input dtype (bf16 or f32)
    k = pl.program_id(1)

    @pl.when(k == 0)
    def _():
        m_sc[...] = jnp.full_like(m_sc, -jnp.inf)
        l_sc[...] = jnp.zeros_like(l_sc)
        acc_sc[...] = jnp.zeros_like(acc_sc)

    hq = hq_ref[...]                            # (TB, TKq, Qp)
    hp = hp_ref[...]                            # (TB, Tp,  Pp)

    # sq = W(hq): one flattened (TB*TKq, Qp) x (Qp, Pp) MXU matmul, f32 acc.
    # (The tile picker keeps TKq a multiple of the sublane count, so this
    #  reshape is layout-free; for odd user Tq it is still value-correct.)
    sq = jnp.dot(hq.reshape(tb * tkq, qp), wt_ref[...],
                 preferred_element_type=jnp.float32)
    sq = (sq + b_ref[...]).reshape(tb, tkq, pp)

    # Transposed scores: s_T[b, j, i] = sum_p hp[b,j,p] * sq[b,i,p]
    #   -> (TB, Tp, TKq); softmax over the LAST axis == Tq (dim=1 of s).
    s_t = jnp.einsum("bjp,bip->bji", hp, sq.astype(mm_dtype),
                     preferred_element_type=jnp.float32)

    # Online-softmax update (exact softmax when there is a single Tq tile).
    m_prev = m_sc[...]                                       # (TB, Tp, 1) f32
    m_new = jnp.maximum(m_prev, jnp.max(s_t, axis=-1, keepdims=True))
    scale = jnp.exp(m_prev - m_new)                          # (TB, Tp, 1)
    p = jnp.exp(s_t - m_new)                                 # (TB, Tp, TKq) f32
    l_sc[...] = scale * l_sc[...] + jnp.sum(p, axis=-1, keepdims=True)
    # q_att accumulation: native (Tp, TKq) x (TKq, Qp) per batch, no transpose.
    acc_sc[...] = scale * acc_sc[...] + jnp.einsum(
        "bji,biq->bjq", p.astype(mm_dtype), hq,
        preferred_element_type=jnp.float32)
    m_sc[...] = m_new

    @pl.when(k == pl.num_programs(1) - 1)
    def _():
        # Exact reciprocal for the strict f32 path; EUP approx for bf16.
        approx = jnp.dtype(mm_dtype) != jnp.dtype(jnp.float32)
        inv = pl.reciprocal(l_sc[...], approx=approx)
        out_ref[...] = (acc_sc[...] * inv).astype(out_ref.dtype)


# ----------------------------------------------------------------------------
# Tile selection / VMEM budgeting
# ----------------------------------------------------------------------------
def _round_up(x, m):
    return (x + m - 1) // m * m


def _pad_last(x, new_last):
    pad = new_last - x.shape[-1]
    if pad == 0:
        return x
    widths = [(0, 0)] * (x.ndim - 1) + [(0, pad)]
    return jnp.pad(x, widths)


def _divisors(n):
    return [d for d in range(1, n + 1) if n % d == 0]


def _vmem_capacity_bytes():
    try:
        return int(pltpu.get_tpu_info().vmem_capacity_bytes)
    except Exception:                             # pragma: no cover
        return 64 * 1024 * 1024                   # conservative (v7x per-TC)


def _vmem_estimate_bytes(tb, tkq, tp, qp, pp, in_sz, out_sz):
    """Per-grid-step VMEM estimate: double-buffered pipelined blocks, the
    weight/bias blocks, persistent f32 scratch and in-kernel intermediates."""
    blocks = 2 * tb * (tkq * qp * in_sz + tp * pp * in_sz + tp * qp * out_sz)
    weights = 2 * (qp * pp * in_sz + pp * 4)      # conservative: 2 buffers
    scratch = tb * tp * qp * 4 + 2 * tb * _round_up(tp, 8) * LANE * 4
    interm = tb * tkq * pp * (4 + in_sz) + tb * tp * tkq * (8 + in_sz)
    return blocks + weights + scratch + interm


def _pick_tiles(B, Tq, Tp, Qp, Pp, in_sz, out_sz, sublane, budget):
    """(batch_tile, tq_tile) fitting `budget`; prefers sublane-aligned Tq
    tiles and the largest batch tile whose grid has an even number of steps
    (keeps both v7x TensorCores busy), then >= 2 steps, then largest."""
    tq_cands = sorted({d for d in _divisors(Tq) if d == Tq or d % sublane == 0},
                      reverse=True)
    tkq = tq_cands[-1]
    for d in tq_cands:
        if _vmem_estimate_bytes(1, d, Tp, Qp, Pp, in_sz, out_sz) <= budget:
            tkq = d
            break
    fits = [d for d in _divisors(B)
            if _vmem_estimate_bytes(d, tkq, Tp, Qp, Pp, in_sz, out_sz) <= budget]
    if not fits:
        fits = [1]
    even = [d for d in fits if (B // d) % 2 == 0]
    multi = [d for d in fits if B // d >= 2]
    tb = max(even or multi or fits)
    return tb, tkq


# ----------------------------------------------------------------------------
# Wrapper
# ----------------------------------------------------------------------------
_SINGLE_BUFFER_WEIGHTS_OK = True    # flipped off if pl.Buffered(1) unsupported


def bilinear_attention_unit(hq, hp, params, *, compute_dtype=jnp.bfloat16,
                            batch_tile=None, tq_tile=None):
    """Pallas implementation of BilinearAttentionUnit.forward.

    hq: (B, Tq, q_size), hp: (B, Tp, p_size) -> q_att: (B, Tp, q_size)
    params: {"W_w": (p_size, q_size), "W_b": (p_size,)} (PyTorch Linear layout)
    compute_dtype: MXU input dtype (default bf16; accumulation and the softmax
                   stay f32).  Use jnp.float32 for strict f32 matmuls.
    """
    global _SINGLE_BUFFER_WEIGHTS_OK

    B, Tq, Q = hq.shape
    B2, Tp, P = hp.shape
    assert B2 == B, (B, B2)
    mm_dtype = jnp.dtype(compute_dtype)
    out_dtype = hq.dtype

    Qp = _round_up(Q, LANE)
    Pp = _round_up(P, LANE)

    # Lane-dense zero-padded operands (cast first so the pad writes the narrow
    # dtype; all pads/slices are skipped when they would be no-ops).
    hq_p = _pad_last(hq.astype(mm_dtype), Qp)
    hp_p = _pad_last(hp.astype(mm_dtype), Pp)
    w_t = params["W_w"].T.astype(mm_dtype)                      # (Q, P)
    if (Qp, Pp) != (Q, P):
        w_t = jnp.zeros((Qp, Pp), mm_dtype).at[:Q, :P].set(w_t)
    bias = params["W_b"].astype(jnp.float32).reshape(1, P)
    if Pp != P:
        bias = jnp.zeros((1, Pp), jnp.float32).at[:, :P].set(bias)

    in_sz = mm_dtype.itemsize
    out_sz = jnp.dtype(out_dtype).itemsize
    sublane = 16 if in_sz == 2 else 8
    cap = _vmem_capacity_bytes()
    budget = min(cap // 2, 64 * 1024 * 1024)      # ~64 MiB v5e/v6e, ~32 MiB v7x

    tb, tkq = _pick_tiles(B, Tq, Tp, Qp, Pp, in_sz, out_sz, sublane, budget)
    if batch_tile is not None:
        tb = batch_tile
    if tq_tile is not None:
        tkq = tq_tile
    assert B % tb == 0, (B, tb)
    assert Tq % tkq == 0, (Tq, tkq)

    est = _vmem_estimate_bytes(tb, tkq, Tp, Qp, Pp, in_sz, out_sz)
    vmem_limit = int(min(cap * 0.9, max(budget, est) + 16 * 1024 * 1024))

    grid = (B // tb, Tq // tkq)
    # TODO(synk): for B == 1 on v7x, additionally tile Tp on a second parallel
    # grid axis so both TensorCores get work.

    def launch(weight_mode):
        wkw = {} if weight_mode is None else {"pipeline_mode": weight_mode}
        return pl.pallas_call(
            _bilinear_attn_kernel,
            out_shape=jax.ShapeDtypeStruct((B, Tp, Qp), out_dtype),
            grid_spec=pltpu.PrefetchScalarGridSpec(
                num_scalar_prefetch=0,
                grid=grid,
                in_specs=[
                    pl.BlockSpec((tb, tkq, Qp), lambda i, k: (i, k, 0)),  # hq
                    pl.BlockSpec((tb, Tp, Pp), lambda i, k: (i, 0, 0)),   # hp
                    pl.BlockSpec((Qp, Pp), lambda i, k: (0, 0), **wkw),   # W^T
                    pl.BlockSpec((1, Pp), lambda i, k: (0, 0), **wkw),    # bias
                ],
                out_specs=pl.BlockSpec((tb, Tp, Qp), lambda i, k: (i, 0, 0)),
                scratch_shapes=[
                    pltpu.VMEM((tb, Tp, 1), jnp.float32),    # running max m
                    pltpu.VMEM((tb, Tp, 1), jnp.float32),    # running sum l
                    pltpu.VMEM((tb, Tp, Qp), jnp.float32),   # output accumulator
                ],
            ),
            compiler_params=pltpu.CompilerParams(
                dimension_semantics=("parallel", "arbitrary"),
                vmem_limit_bytes=vmem_limit),
        )(hq_p, hp_p, w_t, bias)

    out_padded = None
    if _SINGLE_BUFFER_WEIGHTS_OK:
        try:
            # Grid-invariant weights: a single buffer halves their VMEM cost.
            out_padded = launch(pl.Buffered(1))
        except Exception:                        # pragma: no cover (older jax)
            _SINGLE_BUFFER_WEIGHTS_OK = False
    if out_padded is None:
        out_padded = launch(None)

    return out_padded if Qp == Q else out_padded[:, :, :Q]


# ----------------------------------------------------------------------------
# Pure-JAX references
# ----------------------------------------------------------------------------
def bilinear_attention_ref(hq, hp, params):
    """f32 mirror of the PyTorch forward (HIGHEST matmul precision)."""
    hi = jax.lax.Precision.HIGHEST
    sq = jnp.einsum("btq,pq->btp", hq, params["W_w"], precision=hi)
    sq = sq + params["W_b"]
    s = jnp.einsum("bip,bjp->bij", sq, hp, precision=hi)          # (B, Tq, Tp)
    a = jax.nn.softmax(s, axis=1)                                 # over Tq
    return jnp.einsum("bij,biq->bjq", a, hq, precision=hi)        # (B, Tp, Q)


def bilinear_attention_ref_bf16(hq, hp, params):
    """Reference emulating the kernel's bf16 cast points (f32 accumulation and
    f32 softmax) so the default bf16 path can be checked tightly."""
    dt = jnp.bfloat16
    hq_c = hq.astype(dt)
    hp_c = hp.astype(dt)
    sq = jnp.einsum("btq,pq->btp", hq_c, params["W_w"].astype(dt),
                    preferred_element_type=jnp.float32)
    sq = sq + params["W_b"].astype(jnp.float32)
    s_t = jnp.einsum("bjp,bip->bji", hp_c, sq.astype(dt),
                     preferred_element_type=jnp.float32)
    m = jnp.max(s_t, axis=-1, keepdims=True)
    p = jnp.exp(s_t - m)
    l = jnp.sum(p, axis=-1, keepdims=True)
    num = jnp.einsum("bji,biq->bjq", p.astype(dt), hq_c,
                     preferred_element_type=jnp.float32)
    return (num / l).astype(hq.dtype)


# ----------------------------------------------------------------------------
# Demo / correctness checks
# ----------------------------------------------------------------------------
if __name__ == "__main__":
    B, Tq, Tp = 4, 16, 8       # batch, query seq len, passage seq len
    Q, P = 32, 16              # q_size, p_size

    key = jax.random.PRNGKey(0)
    k_hq, k_hp, k_w, k_b = jax.random.split(key, 4)

    hq = jax.random.normal(k_hq, (B, Tq, Q), jnp.float32)
    hp = jax.random.normal(k_hp, (B, Tp, P), jnp.float32)
    params = {
        "W_w": 0.1 * jax.random.normal(k_w, (P, Q), jnp.float32),  # Linear(Q, P)
        "W_b": 0.1 * jax.random.normal(k_b, (P,), jnp.float32),
    }

    ref = bilinear_attention_ref(hq, hp, params)

    # 1) strict f32 path, single Tq tile.
    out_f32 = jax.block_until_ready(
        bilinear_attention_unit(hq, hp, params, compute_dtype=jnp.float32))
    assert out_f32.shape == (B, Tp, Q), out_f32.shape
    err = jnp.max(jnp.abs(out_f32 - ref))
    assert jnp.allclose(out_f32, ref, atol=1e-4, rtol=1e-4), f"f32 max err {err}"

    # 2) strict f32 path with forced Tq tiling (exercises the online-softmax
    #    "arbitrary" grid axis: grid = (2, 2)).
    out_tiled = jax.block_until_ready(
        bilinear_attention_unit(hq, hp, params, compute_dtype=jnp.float32,
                                tq_tile=8))
    err = jnp.max(jnp.abs(out_tiled - ref))
    assert jnp.allclose(out_tiled, ref, atol=1e-4, rtol=1e-4), (
        f"tiled f32 max err {err}")

    # 3) default bf16 MXU path vs a bf16-emulating reference.
    out_bf16 = jax.block_until_ready(bilinear_attention_unit(hq, hp, params))
    ref_bf16 = bilinear_attention_ref_bf16(hq, hp, params)
    err = jnp.max(jnp.abs(out_bf16 - ref_bf16))
    assert jnp.allclose(out_bf16, ref_bf16, atol=1e-2, rtol=1e-2), (
        f"bf16 max err {err}")

    print("KERNEL_OK")
</pallas_src>

<mosaic_0001>
module attributes {stable_mosaic.version = 11 : i64} {
  func.func @_bilinear_attn_kernel(%arg0: i32, %arg1: i32, %arg2: memref<2x16x128xf32, #tpu.memory_space<vmem>>, %arg3: memref<2x8x128xf32, #tpu.memory_space<vmem>>, %arg4: memref<128x128xf32, #tpu.memory_space<vmem>>, %arg5: memref<1x128xf32, #tpu.memory_space<vmem>>, %arg6: memref<2x8x128xf32, #tpu.memory_space<vmem>>, %arg7: memref<2x8x1xf32, #tpu.memory_space<vmem>>, %arg8: memref<2x8x1xf32, #tpu.memory_space<vmem>>, %arg9: memref<2x8x128xf32, #tpu.memory_space<vmem>>) attributes {dimension_semantics = [#tpu.dimension_semantics<parallel>, #tpu.dimension_semantics<arbitrary>], iteration_bounds = array<i64: 2, 1>, scalar_prefetch = 0 : i64, scratch_operands = 3 : i64, tpu.core_type = #tpu.core_type<tc>, window_params = [{transform_indices = @transform_0, window_bounds = array<i64: 2, 16, 128>}, {transform_indices = @transform_1, window_bounds = array<i64: 2, 8, 128>}, {pipeline_mode = #tpu.pipeline_mode<synchronous>, transform_indices = @transform_2, window_bounds = array<i64: 128, 128>}, {pipeline_mode = #tpu.pipeline_mode<synchronous>, transform_indices = @transform_3, window_bounds = array<i64: 1, 128>}, {transform_indices = @transform_4, window_bounds = array<i64: 2, 8, 128>}]} {
    %c0_i32 = arith.constant 0 : i32
    %0 = arith.cmpi eq, %arg1, %c0_i32 : i32
    %1 = arith.extui %0 : i1 to i32
    %c0_i32_0 = arith.constant 0 : i32
    %2 = arith.cmpi ne, %1, %c0_i32_0 : i32
    scf.if %2 {
      %cst_34 = arith.constant 0xFF800000 : f32
      %38 = vector.broadcast %cst_34 : f32 to vector<2x8x1xf32>
      %c0_35 = arith.constant 0 : index
      %c0_36 = arith.constant 0 : index
      %c0_37 = arith.constant 0 : index
      %39 = vector.load %arg7[%c0_35, %c0_36, %c0_37] : memref<2x8x1xf32, #tpu.memory_space<vmem>>, vector<2x8x1xf32>
      tpu.vector_store %arg7[%c0_35, %c0_36, %c0_37], %38 {strides = array<i32>} : memref<2x8x1xf32, #tpu.memory_space<vmem>>, vector<2x8x1xf32>,
      %cst_38 = arith.constant 0.000000e+00 : f32
      %40 = vector.broadcast %cst_38 : f32 to vector<2x8x1xf32>
      %c0_39 = arith.constant 0 : index
      %c0_40 = arith.constant 0 : index
      %c0_41 = arith.constant 0 : index
      %41 = vector.load %arg8[%c0_39, %c0_40, %c0_41] : memref<2x8x1xf32, #tpu.memory_space<vmem>>, vector<2x8x1xf32>
      tpu.vector_store %arg8[%c0_39, %c0_40, %c0_41], %40 {strides = array<i32>} : memref<2x8x1xf32, #tpu.memory_space<vmem>>, vector<2x8x1xf32>,
      %cst_42 = arith.constant 0.000000e+00 : f32
      %42 = vector.broadcast %cst_42 : f32 to vector<2x8x128xf32>
      %c0_43 = arith.constant 0 : index
      %c0_44 = arith.constant 0 : index
      %c0_45 = arith.constant 0 : index
      %43 = vector.load %arg9[%c0_43, %c0_44, %c0_45] : memref<2x8x128xf32, #tpu.memory_space<vmem>>, vector<2x8x128xf32>
      tpu.vector_store %arg9[%c0_43, %c0_44, %c0_45], %42 {strides = array<i32>} : memref<2x8x128xf32, #tpu.memory_space<vmem>>, vector<2x8x128xf32>,
    } else {
    }
    %c0 = arith.constant 0 : index
    %c0_1 = arith.constant 0 : index
    %c0_2 = arith.constant 0 : index
    %3 = vector.load %arg2[%c0, %c0_1, %c0_2] : memref<2x16x128xf32, #tpu.memory_space<vmem>>, vector<2x16x128xf32>
    %c0_3 = arith.constant 0 : index
    %c0_4 = arith.constant 0 : index
    %c0_5 = arith.constant 0 : index
    %4 = vector.load %arg3[%c0_3, %c0_4, %c0_5] : memref<2x8x128xf32, #tpu.memory_space<vmem>>, vector<2x8x128xf32>
    %5 = vector.shape_cast %3 : vector<2x16x128xf32> to vector<32x128xf32>
    %c0_6 = arith.constant 0 : index
    %c0_7 = arith.constant 0 : index
    %6 = vector.load %arg4[%c0_6, %c0_7] : memref<128x128xf32, #tpu.memory_space<vmem>>, vector<128x128xf32>
    %cst = arith.constant dense<0.000000e+00> : vector<32x128xf32>
    %7 = tpu.matmul %5, %6, %cst {dimension_numbers = #tpu.dot_dimension_numbers<[1], [0], [0], [1], [0, 0, 1, 1], [], []>} : vector<32x128xf32>, vector<128x128xf32>, vector<32x128xf32> -> vector<32x128xf32>
    %c0_8 = arith.constant 0 : index
    %c0_9 = arith.constant 0 : index
    %8 = vector.load %arg5[%c0_8, %c0_9] : memref<1x128xf32, #tpu.memory_space<vmem>>, vector<1x128xf32>
    %9 = vector.broadcast %8 : vector<1x128xf32> to vector<32x128xf32>
    %10 = arith.addf %7, %9 : vector<32x128xf32>
    %11 = vector.shape_cast %10 : vector<32x128xf32> to vector<2x16x128xf32>
    "tpu.trace_start"() <{level = 10 : i32, message = "bjp,bip->bji"}> : () -> ()
    %cst_10 = arith.constant dense<0.000000e+00> : vector<2x8x16xf32>
    %12 = tpu.matmul %4, %11, %cst_10 {dimension_numbers = #tpu.dot_dimension_numbers<[2], [2], [1], [1], [0, 0, 0, 1, 1, 1], [0], [0]>} : vector<2x8x128xf32>, vector<2x16x128xf32>, vector<2x8x16xf32> -> vector<2x8x16xf32>
    "tpu.trace_stop"() : () -> ()
    %c0_11 = arith.constant 0 : index
    %c0_12 = arith.constant 0 : index
    %c0_13 = arith.constant 0 : index
    %13 = vector.load %arg7[%c0_11, %c0_12, %c0_13] : memref<2x8x1xf32, #tpu.memory_space<vmem>>, vector<2x8x1xf32>
    %cst_14 = arith.constant dense<0xFF800000> : vector<2x8xf32>
    %14 = vector.multi_reduction <maximumf>, %12, %cst_14 [2] : vector<2x8x16xf32> to vector<2x8xf32>
    %15 = vector.shape_cast %14 : vector<2x8xf32> to vector<2x8x1xf32>
    %16 = arith.maximumf %13, %15 : vector<2x8x1xf32>
    %17 = arith.subf %13, %16 : vector<2x8x1xf32>
    %18 = math.exp %17 : vector<2x8x1xf32>
    %19 = vector.broadcast %16 : vector<2x8x1xf32> to vector<2x8x16xf32>
    %20 = arith.subf %12, %19 : vector<2x8x16xf32>
    %21 = math.exp %20 : vector<2x8x16xf32>
    %c0_15 = arith.constant 0 : index
    %c0_16 = arith.constant 0 : index
    %c0_17 = arith.constant 0 : index
    %22 = vector.load %arg8[%c0_15, %c0_16, %c0_17] : memref<2x8x1xf32, #tpu.memory_space<vmem>>, vector<2x8x1xf32>
    %23 = arith.mulf %18, %22 : vector<2x8x1xf32>
    %cst_18 = arith.constant dense<0.000000e+00> : vector<2x8xf32>
    %24 = vector.multi_reduction <add>, %21, %cst_18 [2] : vector<2x8x16xf32> to vector<2x8xf32>
    %25 = vector.shape_cast %24 : vector<2x8xf32> to vector<2x8x1xf32>
    %26 = arith.addf %23, %25 : vector<2x8x1xf32>
    %c0_19 = arith.constant 0 : index
    %c0_20 = arith.constant 0 : index
    %c0_21 = arith.constant 0 : index
    %27 = vector.load %arg8[%c0_19, %c0_20, %c0_21] : memref<2x8x1xf32, #tpu.memory_space<vmem>>, vector<2x8x1xf32>
    tpu.vector_store %arg8[%c0_19, %c0_20, %c0_21], %26 {strides = array<i32>} : memref<2x8x1xf32, #tpu.memory_space<vmem>>, vector<2x8x1xf32>,
    %c0_22 = arith.constant 0 : index
    %c0_23 = arith.constant 0 : index
    %c0_24 = arith.constant 0 : index
    %28 = vector.load %arg9[%c0_22, %c0_23, %c0_24] : memref<2x8x128xf32, #tpu.memory_space<vmem>>, vector<2x8x128xf32>
    %29 = vector.broadcast %18 : vector<2x8x1xf32> to vector<2x8x128xf32>
    %30 = arith.mulf %29, %28 : vector<2x8x128xf32>
    "tpu.trace_start"() <{level = 10 : i32, message = "bji,biq->bjq"}> : () -> ()
    %cst_25 = arith.constant dense<0.000000e+00> : vector<2x8x128xf32>
    %31 = tpu.matmul %21, %3, %cst_25 {dimension_numbers = #tpu.dot_dimension_numbers<[2], [1], [1], [2], [0, 0, 0, 1, 1, 2], [0], [0]>} : vector<2x8x16xf32>, vector<2x16x128xf32>, vector<2x8x128xf32> -> vector<2x8x128xf32>
    "tpu.trace_stop"() : () -> ()
    %32 = arith.addf %30, %31 : vector<2x8x128xf32>
    %c0_26 = arith.constant 0 : index
    %c0_27 = arith.constant 0 : index
    %c0_28 = arith.constant 0 : index
    %33 = vector.load %arg9[%c0_26, %c0_27, %c0_28] : memref<2x8x128xf32, #tpu.memory_space<vmem>>, vector<2x8x128xf32>
    tpu.vector_store %arg9[%c0_26, %c0_27, %c0_28], %32 {strides = array<i32>} : memref<2x8x128xf32, #tpu.memory_space<vmem>>, vector<2x8x128xf32>,
    %c0_29 = arith.constant 0 : index
    %c0_30 = arith.constant 0 : index
    %c0_31 = arith.constant 0 : index
    %34 = vector.load %arg7[%c0_29, %c0_30, %c0_31] : memref<2x8x1xf32, #tpu.memory_space<vmem>>, vector<2x8x1xf32>
    tpu.vector_store %arg7[%c0_29, %c0_30, %c0_31], %16 {strides = array<i32>} : memref<2x8x1xf32, #tpu.memory_space<vmem>>, vector<2x8x1xf32>,
    %c0_i32_32 = arith.constant 0 : i32
    %35 = arith.cmpi eq, %arg1, %c0_i32_32 : i32
    %36 = arith.extui %35 : i1 to i32
    %c0_i32_33 = arith.constant 0 : i32
    %37 = arith.cmpi ne, %36, %c0_i32_33 : i32
    scf.if %37 {
      %c0_34 = arith.constant 0 : index
      %c0_35 = arith.constant 0 : index
      %c0_36 = arith.constant 0 : index
      %38 = vector.load %arg8[%c0_34, %c0_35, %c0_36] : memref<2x8x1xf32, #tpu.memory_space<vmem>>, vector<2x8x1xf32>
      %39 = tpu.reciprocal %38 : vector<2x8x1xf32> -> vector<2x8x1xf32>
      %c0_37 = arith.constant 0 : index
      %c0_38 = arith.constant 0 : index
      %c0_39 = arith.constant 0 : index
      %40 = vector.load %arg9[%c0_37, %c0_38, %c0_39] : memref<2x8x128xf32, #tpu.memory_space<vmem>>, vector<2x8x128xf32>
      %41 = vector.broadcast %39 : vector<2x8x1xf32> to vector<2x8x128xf32>
      %42 = arith.mulf %40, %41 : vector<2x8x128xf32>
      %c0_40 = arith.constant 0 : index
      %c0_41 = arith.constant 0 : index
      %c0_42 = arith.constant 0 : index
      %43 = vector.load %arg6[%c0_40, %c0_41, %c0_42] : memref<2x8x128xf32, #tpu.memory_space<vmem>>, vector<2x8x128xf32>
      tpu.vector_store %arg6[%c0_40, %c0_41, %c0_42], %42 {strides = array<i32>} : memref<2x8x128xf32, #tpu.memory_space<vmem>>, vector<2x8x128xf32>,
    } else {
    }
    return
  }
  func.func @transform_0(%arg0: i32, %arg1: i32) -> (i32, i32, i32) {
    %c0_i32 = arith.constant 0 : i32
    %c0_i32_0 = arith.constant 0 : i32
    return %arg0, %arg1, %c0_i32 : i32, i32, i32
  }
  func.func @transform_1(%arg0: i32, %arg1: i32) -> (i32, i32, i32) {
    %c0_i32 = arith.constant 0 : i32
    %c0_i32_0 = arith.constant 0 : i32
    %c0_i32_1 = arith.constant 0 : i32
    return %arg0, %c0_i32, %c0_i32_0 : i32, i32, i32
  }
  func.func @transform_2(%arg0: i32, %arg1: i32) -> (i32, i32) {
    %c0_i32 = arith.constant 0 : i32
    %c0_i32_0 = arith.constant 0 : i32
    %c0_i32_1 = arith.constant 0 : i32
    return %c0_i32, %c0_i32_0 : i32, i32
  }
  func.func @transform_3(%arg0: i32, %arg1: i32) -> (i32, i32) {
    %c0_i32 = arith.constant 0 : i32
    %c0_i32_0 = arith.constant 0 : i32
    %c0_i32_1 = arith.constant 0 : i32
    return %c0_i32, %c0_i32_0 : i32, i32
  }
  func.func @transform_4(%arg0: i32, %arg1: i32) -> (i32, i32, i32) {
    %c0_i32 = arith.constant 0 : i32
    %c0_i32_0 = arith.constant 0 : i32
    %c0_i32_1 = arith.constant 0 : i32
    return %arg0, %c0_i32, %c0_i32_0 : i32, i32, i32
  }
}

module attributes {stable_mosaic.version = 11 : i64} {
  func.func @_bilinear_attn_kernel(%arg0: i32, %arg1: i32, %arg2: memref<2x16x128xf32, #tpu.memory_space<vmem>>, %arg3: memref<2x8x128xf32, #tpu.memory_space<vmem>>, %arg4: memref<128x128xf32, #tpu.memory_space<vmem>>, %arg5: memref<1x128xf32, #tpu.memory_space<vmem>>, %arg6: memref<2x8x128xf32, #tpu.memory_space<vmem>>, %arg7: memref<2x8x1xf32, #tpu.memory_space<vmem>>, %arg8: memref<2x8x1xf32, #tpu.memory_space<vmem>>, %arg9: memref<2x8x128xf32, #tpu.memory_space<vmem>>) attributes {dimension_semantics = [#tpu.dimension_semantics<parallel>, #tpu.dimension_semantics<arbitrary>], iteration_bounds = array<i64: 2, 1>, scalar_prefetch = 0 : i64, scratch_operands = 3 : i64, tpu.core_type = #tpu.core_type<tc>, window_params = [{transform_indices = @transform_0, window_bounds = array<i64: 2, 16, 128>}, {transform_indices = @transform_1, window_bounds = array<i64: 2, 8, 128>}, {pipeline_mode = #tpu.pipeline_mode<synchronous>, transform_indices = @transform_2, window_bounds = array<i64: 128, 128>}, {pipeline_mode = #tpu.pipeline_mode<synchronous>, transform_indices = @transform_3, window_bounds = array<i64: 1, 128>}, {transform_indices = @transform_4, window_bounds = array<i64: 2, 8, 128>}]} {
    %c0_i32 = arith.constant 0 : i32
    %0 = arith.cmpi eq, %arg1, %c0_i32 : i32
    %1 = arith.extui %0 : i1 to i32
    %c0_i32_0 = arith.constant 0 : i32
    %2 = arith.cmpi ne, %1, %c0_i32_0 : i32
    scf.if %2 {
      %cst_34 = arith.constant 0xFF800000 : f32
      %38 = vector.broadcast %cst_34 : f32 to vector<2x8x1xf32>
      %c0_35 = arith.constant 0 : index
      %c0_36 = arith.constant 0 : index
      %c0_37 = arith.constant 0 : index
      %39 = vector.load %arg7[%c0_35, %c0_36, %c0_37] : memref<2x8x1xf32, #tpu.memory_space<vmem>>, vector<2x8x1xf32>
      tpu.vector_store %arg7[%c0_35, %c0_36, %c0_37], %38 {strides = array<i32>} : memref<2x8x1xf32, #tpu.memory_space<vmem>>, vector<2x8x1xf32>,
      %cst_38 = arith.constant 0.000000e+00 : f32
      %40 = vector.broadcast %cst_38 : f32 to vector<2x8x1xf32>
      %c0_39 = arith.constant 0 : index
      %c0_40 = arith.constant 0 : index
      %c0_41 = arith.constant 0 : index
      %41 = vector.load %arg8[%c0_39, %c0_40, %c0_41] : memref<2x8x1xf32, #tpu.memory_space<vmem>>, vector<2x8x1xf32>
      tpu.vector_store %arg8[%c0_39, %c0_40, %c0_41], %40 {strides = array<i32>} : memref<2x8x1xf32, #tpu.memory_space<vmem>>, vector<2x8x1xf32>,
      %cst_42 = arith.constant 0.000000e+00 : f32
      %42 = vector.broadcast %cst_42 : f32 to vector<2x8x128xf32>
      %c0_43 = arith.constant 0 : index
      %c0_44 = arith.constant 0 : index
      %c0_45 = arith.constant 0 : index
      %43 = vector.load %arg9[%c0_43, %c0_44, %c0_45] : memref<2x8x128xf32, #tpu.memory_space<vmem>>, vector<2x8x128xf32>
      tpu.vector_store %arg9[%c0_43, %c0_44, %c0_45], %42 {strides = array<i32>} : memref<2x8x128xf32, #tpu.memory_space<vmem>>, vector<2x8x128xf32>,
    } else {
    }
    %c0 = arith.constant 0 : index
    %c0_1 = arith.constant 0 : index
    %c0_2 = arith.constant 0 : index
    %3 = vector.load %arg2[%c0, %c0_1, %c0_2] : memref<2x16x128xf32, #tpu.memory_space<vmem>>, vector<2x16x128xf32>
    %c0_3 = arith.constant 0 : index
    %c0_4 = arith.constant 0 : index
    %c0_5 = arith.constant 0 : index
    %4 = vector.load %arg3[%c0_3, %c0_4, %c0_5] : memref<2x8x128xf32, #tpu.memory_space<vmem>>, vector<2x8x128xf32>
    %5 = vector.shape_cast %3 : vector<2x16x128xf32> to vector<32x128xf32>
    %c0_6 = arith.constant 0 : index
    %c0_7 = arith.constant 0 : index
    %6 = vector.load %arg4[%c0_6, %c0_7] : memref<128x128xf32, #tpu.memory_space<vmem>>, vector<128x128xf32>
    %cst = arith.constant dense<0.000000e+00> : vector<32x128xf32>
    %7 = tpu.matmul %5, %6, %cst {dimension_numbers = #tpu.dot_dimension_numbers<[1], [0], [0], [1], [0, 0, 1, 1], [], []>} : vector<32x128xf32>, vector<128x128xf32>, vector<32x128xf32> -> vector<32x128xf32>
    %c0_8 = arith.constant 0 : index
    %c0_9 = arith.constant 0 : index
    %8 = vector.load %arg5[%c0_8, %c0_9] : memref<1x128xf32, #tpu.memory_space<vmem>>, vector<1x128xf32>
    %9 = vector.broadcast %8 : vector<1x128xf32> to vector<32x128xf32>
    %10 = arith.addf %7, %9 : vector<32x128xf32>
    %11 = vector.shape_cast %10 : vector<32x128xf32> to vector<2x16x128xf32>
    "tpu.trace_start"() <{level = 10 : i32, message = "bjp,bip->bji"}> : () -> ()
    %cst_10 = arith.constant dense<0.000000e+00> : vector<2x8x16xf32>
    %12 = tpu.matmul %4, %11, %cst_10 {dimension_numbers = #tpu.dot_dimension_numbers<[2], [2], [1], [1], [0, 0, 0, 1, 1, 1], [0], [0]>} : vector<2x8x128xf32>, vector<2x16x128xf32>, vector<2x8x16xf32> -> vector<2x8x16xf32>
    "tpu.trace_stop"() : () -> ()
    %c0_11 = arith.constant 0 : index
    %c0_12 = arith.constant 0 : index
    %c0_13 = arith.constant 0 : index
    %13 = vector.load %arg7[%c0_11, %c0_12, %c0_13] : memref<2x8x1xf32, #tpu.memory_space<vmem>>, vector<2x8x1xf32>
    %cst_14 = arith.constant dense<0xFF800000> : vector<2x8xf32>
    %14 = vector.multi_reduction <maximumf>, %12, %cst_14 [2] : vector<2x8x16xf32> to vector<2x8xf32>
    %15 = vector.shape_cast %14 : vector<2x8xf32> to vector<2x8x1xf32>
    %16 = arith.maximumf %13, %15 : vector<2x8x1xf32>
    %17 = arith.subf %13, %16 : vector<2x8x1xf32>
    %18 = math.exp %17 : vector<2x8x1xf32>
    %19 = vector.broadcast %16 : vector<2x8x1xf32> to vector<2x8x16xf32>
    %20 = arith.subf %12, %19 : vector<2x8x16xf32>
    %21 = math.exp %20 : vector<2x8x16xf32>
    %c0_15 = arith.constant 0 : index
    %c0_16 = arith.constant 0 : index
    %c0_17 = arith.constant 0 : index
    %22 = vector.load %arg8[%c0_15, %c0_16, %c0_17] : memref<2x8x1xf32, #tpu.memory_space<vmem>>, vector<2x8x1xf32>
    %23 = arith.mulf %18, %22 : vector<2x8x1xf32>
    %cst_18 = arith.constant dense<0.000000e+00> : vector<2x8xf32>
    %24 = vector.multi_reduction <add>, %21, %cst_18 [2] : vector<2x8x16xf32> to vector<2x8xf32>
    %25 = vector.shape_cast %24 : vector<2x8xf32> to vector<2x8x1xf32>
    %26 = arith.addf %23, %25 : vector<2x8x1xf32>
    %c0_19 = arith.constant 0 : index
    %c0_20 = arith.constant 0 : index
    %c0_21 = arith.constant 0 : index
    %27 = vector.load %arg8[%c0_19, %c0_20, %c0_21] : memref<2x8x1xf32, #tpu.memory_space<vmem>>, vector<2x8x1xf32>
    tpu.vector_store %arg8[%c0_19, %c0_20, %c0_21], %26 {strides = array<i32>} : memref<2x8x1xf32, #tpu.memory_space<vmem>>, vector<2x8x1xf32>,
    %c0_22 = arith.constant 0 : index
    %c0_23 = arith.constant 0 : index
    %c0_24 = arith.constant 0 : index
    %28 = vector.load %arg9[%c0_22, %c0_23, %c0_24] : memref<2x8x128xf32, #tpu.memory_space<vmem>>, vector<2x8x128xf32>
    %29 = vector.broadcast %18 : vector<2x8x1xf32> to vector<2x8x128xf32>
    %30 = arith.mulf %29, %28 : vector<2x8x128xf32>
    "tpu.trace_start"() <{level = 10 : i32, message = "bji,biq->bjq"}> : () -> ()
    %cst_25 = arith.constant dense<0.000000e+00> : vector<2x8x128xf32>
    %31 = tpu.matmul %21, %3, %cst_25 {dimension_numbers = #tpu.dot_dimension_numbers<[2], [1], [1], [2], [0, 0, 0, 1, 1, 2], [0], [0]>} : vector<2x8x16xf32>, vector<2x16x128xf32>, vector<2x8x128xf32> -> vector<2x8x128xf32>
    "tpu.trace_stop"() : () -> ()
    %32 = arith.addf %30, %31 : vector<2x8x128xf32>
    %c0_26 = arith.constant 0 : index
    %c0_27 = arith.constant 0 : index
    %c0_28 = arith.constant 0 : index
    %33 = vector.load %arg9[%c0_26, %c0_27, %c0_28] : memref<2x8x128xf32, #tpu.memory_space<vmem>>, vector<2x8x128xf32>
    tpu.vector_store %arg9[%c0_26, %c0_27, %c0_28], %32 {strides = array<i32>} : memref<2x8x128xf32, #tpu.memory_space<vmem>>, vector<2x8x128xf32>,
    %c0_29 = arith.constant 0 : index
    %c0_30 = arith.constant 0 : index
    %c0_31 = arith.constant 0 : index
    %34 = vector.load %arg7[%c0_29, %c0_30, %c0_31] : memref<2x8x1xf32, #tpu.memory_space<vmem>>, vector<2x8x1xf32>
    tpu.vector_store %arg7[%c0_29, %c0_30, %c0_31], %16 {strides = array<i32>} : memref<2x8x1xf32, #tpu.memory_space<vmem>>, vector<2x8x1xf32>,
    %c0_i32_32 = arith.constant 0 : i32
    %35 = arith.cmpi eq, %arg1, %c0_i32_32 : i32
    %36 = arith.extui %35 : i1 to i32
    %c0_i32_33 = arith.constant 0 : i32
    %37 = arith.cmpi ne, %36, %c0_i32_33 : i32
    scf.if %37 {
      %c0_34 = arith.constant 0 : index
      %c0_35 = arith.constant 0 : index
      %c0_36 = arith.constant 0 : index
      %38 = vector.load %arg8[%c0_34, %c0_35, %c0_36] : memref<2x8x1xf32, #tpu.memory_space<vmem>>, vector<2x8x1xf32>
      %39 = tpu.reciprocal %38 : vector<2x8x1xf32> -> vector<2x8x1xf32>
      %c0_37 = arith.constant 0 : index
      %c0_38 = arith.constant 0 : index
      %c0_39 = arith.constant 0 : index
      %40 = vector.load %arg9[%c0_37, %c0_38, %c0_39] : memref<2x8x128xf32, #tpu.memory_space<vmem>>, vector<2x8x128xf32>
      %41 = vector.broadcast %39 : vector<2x8x1xf32> to vector<2x8x128xf32>
      %42 = arith.mulf %40, %41 : vector<2x8x128xf32>
      %c0_40 = arith.constant 0 : index
      %c0_41 = arith.constant 0 : index
      %c0_42 = arith.constant 0 : index
      %43 = vector.load %arg6[%c0_40, %c0_41, %c0_42] : memref<2x8x128xf32, #tpu.memory_space<vmem>>, vector<2x8x128xf32>
      tpu.vector_store %arg6[%c0_40, %c0_41, %c0_42], %42 {strides = array<i32>} : memref<2x8x128xf32, #tpu.memory_space<vmem>>, vector<2x8x128xf32>,
    } else {
    }
    return
  }
  func.func @transform_0(%arg0: i32, %arg1: i32) -> (i32, i32, i32) {
    %c0_i32 = arith.constant 0 : i32
    %c0_i32_0 = arith.constant 0 : i32
    return %arg0, %arg1, %c0_i32 : i32, i32, i32
  }
  func.func @transform_1(%arg0: i32, %arg1: i32) -> (i32, i32, i32) {
    %c0_i32 = arith.constant 0 : i32
    %c0_i32_0 = arith.constant 0 : i32
    %c0_i32_1 = arith.constant 0 : i32
    return %arg0, %c0_i32, %c0_i32_0 : i32, i32, i32
  }
  func.func @transform_2(%arg0: i32, %arg1: i32) -> (i32, i32) {
    %c0_i32 = arith.constant 0 : i32
    %c0_i32_0 = arith.constant 0 : i32
    %c0_i32_1 = arith.constant 0 : i32
    return %c0_i32, %c0_i32_0 : i32, i32
  }
  func.func @transform_3(%arg0: i32, %arg1: i32) -> (i32, i32) {
    %c0_i32 = arith.constant 0 : i32
    %c0_i32_0 = arith.constant 0 : i32
    %c0_i32_1 = arith.constant 0 : i32
    return %c0_i32, %c0_i32_0 : i32, i32
  }
  func.func @transform_4(%arg0: i32, %arg1: i32) -> (i32, i32, i32) {
    %c0_i32 = arith.constant 0 : i32
    %c0_i32_0 = arith.constant 0 : i32
    %c0_i32_1 = arith.constant 0 : i32
    return %arg0, %c0_i32, %c0_i32_0 : i32, i32, i32
  }
}

</mosaic_0001>

<llo_original>
// kernel: tpu_custom_call.1
$region0: #{tpu_custom_call.1}
  #allocation0 [shape = 'u32[]', space=smem, size = 0x4, offset = 0x4, fixed_abs, tag = 'smem constant byte address 0x4 - core index']
  #allocation1 [shape = 'u32[72,128]{1,0:T(1,128)}', space=vmem, size = 0x9000, scoped, tag = 'internal scratch']
  #allocation2 [shape = 'f32[2,8,1]{2,1,0:T(8,128)}', space=vmem, size = 0x2000, scoped, tag = 'scratch operand']
  #allocation3 [shape = 'f32[2,8,1]{2,1,0:T(8,128)}', space=vmem, size = 0x2000, scoped, tag = 'scratch operand']
  #allocation4 [shape = 'f32[2,8,128]{2,1,0:T(8,128)}', space=vmem, size = 0x2000, scoped, tag = 'scratch operand']
  %s0 = inlined_call_operand.hbm [shape: f32[4,16,128], index: 0, kind: input, shape index: {}]
  %s1 = inlined_call_operand.hbm [shape: f32[4,8,128], index: 1, kind: input, shape index: {}]
  %s2 = inlined_call_operand.hbm [shape: f32[128,128], index: 2, kind: input, shape index: {}]
  %s3 = inlined_call_operand.vmem [shape: f32[1,128], index: 3, kind: input, shape index: {}]
  %s4 = inlined_call_operand.hbm [shape: f32[4,8,128], index: 4, kind: output, shape index: {}]
  %s5 = sld [smem:[#allocation0]]
  $region69: #{tpu_custom_call.1} parent=0
    _
  %s7 = ssub.s32 1, %s5
  %s8 = scalar_select 0, %s7, %s5
  $region1: #{tpu_custom_call.1} parent=0
    #allocation5 [shape = 'u8[32768]{0}', space=vmem, size = 0x8000, scoped, tag = 'input window, operand 0']
    #allocation6 [shape = 's32[2]{0}', space=sflag, size = 0x8, scoped, tag = 'scoped memory for tpu_custom_call.1']
    #allocation7 [shape = 's32[2]{0}', space=sflag, size = 0x8, scoped, tag = 'scoped memory for tpu_custom_call.1']
    #allocation8 [shape = 'u8[16384]{0}', space=vmem, size = 0x4000, scoped, tag = 'input window, operand 1']
    #allocation9 [shape = 's32[2]{0}', space=sflag, size = 0x8, scoped, tag = 'scoped memory for tpu_custom_call.1']
    #allocation10 [shape = 'u8[65536]{0}', space=vmem, size = 0x10000, scoped, tag = 'input window, operand 2, single buffered']
    #allocation11 [shape = 'u8[16384]{0}', space=vmem, size = 0x4000, scoped, tag = 'output window, operand 0']
    %9 = vsyncpa [#allocation6], 0
    %s10 = scalar_lea.sflag [#allocation6], 1
    %11 = vsyncpa %s10, 0
    %12 = vsyncpa [#allocation9], 0
    %s13 = scalar_lea.sflag [#allocation9], 1
    %14 = vsyncpa %s13, 0
    %15 = vsyncpa [#allocation7], 0
    %s16 = scalar_lea.sflag [#allocation7], 1
    %17 = vsyncpa %s16, 0
    loop: start=0, step=1, limit=4
    $region2: #{tpu_custom_call.1} parent=1 // loop_pre_header
      _
    $region3: #{tpu_custom_call.1} parent=1 // loop_header
      %s19 = sphi 0, %s23
      %p20 = scmp.ge.s32.totalorder %s19, 4
      %s26 = sphi 0, %s38
      %s27 = sphi 0, %s34
      %s28 = sphi 0, %s26
      %s29 = sphi 0, %s27
      %s30 = sphi 0, %s28
      %s31 = sphi 0, %s29
      %s43 = sphi 0, %s45
      %s46 = sphi 0, %s43
      %s47 = sphi 0, %s46
      %s63 = sphi 0, %s47
      %s69 = sphi 0, %s71
      %s72 = sphi 0, %s69
      %s73 = sphi 0, %s72
      %s89 = sphi 0, %s73
      %s93 = sphi 0, %s93
      %s95 = sphi 0, %s93
      %s96 = sphi 0, %s95
      %s110 = sphi 0, %s96
      %s114 = sphi 0, %s114
      %s116 = sphi 0, %s114
      %s117 = sphi 0, %s116
      %s131 = sphi 0, %s117
      %s137 = sphi 0, %s139
      %s140 = sphi 0, %s137
      %s141 = sphi 0, %s140
      %s157 = sphi 0, %s141
    $region4: #{tpu_custom_call.1} parent=1 // loop_header_branch
      %22 = sbr.rel (%p20) target = $region8
    $region5: #{tpu_custom_call.1} parent=1 // loop_body
      %s24 = ssub.s32 %s19, 1
      %s25 = ssub.s32 %s19, 2
      %s32 = sadd.s32 1, %s27
      %p33 = scmp.ge.s32.totalorder %s32, 1
      %s34 = scalar_select %p33, 0, %s32
      %s35 = sadd.s32 1, %s26
      %s36 = scalar_select %p33, %s35, %s26
      %p37 = scmp.ge.s32.totalorder %s36, 2
      %s38 = scalar_select %p37, 0, %s36
      %s39 = ssub.s32 %s26, %s38
      %s40 = ssub.s32 %s27, %s34
      %s41 = sor.u32 %s39, %s40
      %p42 = scmp.eq.s32.totalorder %s41, 0
      %s44 = sadd.s32 %s43, 1
      %s45 = scalar_select %p42, %s43, %s44
      %p48 = pneg %p42
      %p49 = scmp.eq.s32.totalorder %s19, 1
      %p50 = por %p48, %p49
      %p51 = scmp.ne.s32.totalorder %s43, %s46
      %p52 = scmp.eq.s32.totalorder %s19, 0
      %p53 = por %p51, %p52
      %p54 = scmp.ne.s32.totalorder %s43, %s46
      %p55 = scmp.eq.s32.totalorder %s24, 1
      %p56 = por %p54, %p55
      %p57 = scmp.ne.s32.totalorder %s46, %s47
      %p58 = scmp.eq.s32.totalorder %s24, 0
      %p59 = por %p57, %p58
      %p60 = scmp.ne.s32.totalorder %s46, %s47
      %p61 = scmp.eq.s32.totalorder %s25, 1
      %p62 = por %p60, %p61
      %p64 = scmp.ne.s32.totalorder %s47, %s63
      %p65 = scmp.eq.s32.totalorder %s25, 0
      %p66 = por %p64, %p65
      %s67 = ssub.s32 %s26, %s38
      %p68 = scmp.eq.s32.totalorder %s67, 0
      %s70 = sadd.s32 %s69, 1
      %s71 = scalar_select %p68, %s69, %s70
      %p74 = pneg %p68
      %p75 = scmp.eq.s32.totalorder %s19, 1
      %p76 = por %p74, %p75
      %p77 = scmp.ne.s32.totalorder %s69, %s72
      %p78 = scmp.eq.s32.totalorder %s19, 0
      %p79 = por %p77, %p78
      %p80 = scmp.ne.s32.totalorder %s69, %s72
      %p81 = scmp.eq.s32.totalorder %s24, 1
      %p82 = por %p80, %p81
      %p83 = scmp.ne.s32.totalorder %s72, %s73
      %p84 = scmp.eq.s32.totalorder %s24, 0
      %p85 = por %p83, %p84
      %p86 = scmp.ne.s32.totalorder %s72, %s73
      %p87 = scmp.eq.s32.totalorder %s25, 1
      %p88 = por %p86, %p87
      %p90 = scmp.ne.s32.totalorder %s73, %s89
      %p91 = scmp.eq.s32.totalorder %s25, 0
      %p92 = por %p90, %p91
      %s94 = sadd.s32 %s93, 1
      %p97 = scmp.eq.s32.totalorder %s19, 1
      %p98 = scmp.ne.s32.totalorder %s93, %s95
      %p99 = scmp.eq.s32.totalorder %s19, 0
      %p100 = por %p98, %p99
      %p101 = scmp.ne.s32.totalorder %s93, %s95
      %p102 = scmp.eq.s32.totalorder %s24, 1
      %p103 = por %p101, %p102
      %p104 = scmp.ne.s32.totalorder %s95, %s96
      %p105 = scmp.eq.s32.totalorder %s24, 0
      %p106 = por %p104, %p105
      %p107 = scmp.ne.s32.totalorder %s95, %s96
      %p108 = scmp.eq.s32.totalorder %s25, 1
      %p109 = por %p107, %p108
      %p111 = scmp.ne.s32.totalorder %s96, %s110
      %p112 = scmp.eq.s32.totalorder %s25, 0
      %p113 = por %p111, %p112
      %s115 = sadd.s32 %s114, 1
      %p118 = scmp.eq.s32.totalorder %s19, 1
      %p119 = scmp.ne.s32.totalorder %s114, %s116
      %p120 = scmp.eq.s32.totalorder %s19, 0
      %p121 = por %p119, %p120
      %p122 = scmp.ne.s32.totalorder %s114, %s116
      %p123 = scmp.eq.s32.totalorder %s24, 1
      %p124 = por %p122, %p123
      %p125 = scmp.ne.s32.totalorder %s116, %s117
      %p126 = scmp.eq.s32.totalorder %s24, 0
      %p127 = por %p125, %p126
      %p128 = scmp.ne.s32.totalorder %s116, %s117
      %p129 = scmp.eq.s32.totalorder %s25, 1
      %p130 = por %p128, %p129
      %p132 = scmp.ne.s32.totalorder %s117, %s131
      %p133 = scmp.eq.s32.totalorder %s25, 0
      %p134 = por %p132, %p133
      %s135 = ssub.s32 %s26, %s38
      %p136 = scmp.eq.s32.totalorder %s135, 0
      %s138 = sadd.s32 %s137, 1
      %s139 = scalar_select %p136, %s137, %s138
      %p142 = pneg %p136
      %p143 = scmp.eq.s32.totalorder %s19, 1
      %p144 = por %p142, %p143
      %p145 = scmp.ne.s32.totalorder %s137, %s140
      %p146 = scmp.eq.s32.totalorder %s19, 0
      %p147 = por %p145, %p146
      %p148 = scmp.ne.s32.totalorder %s137, %s140
      %p149 = scmp.eq.s32.totalorder %s24, 1
      %p150 = por %p148, %p149
      %p151 = scmp.ne.s32.totalorder %s140, %s141
      %p152 = scmp.eq.s32.totalorder %s24, 0
      %p153 = por %p151, %p152
      %p154 = scmp.ne.s32.totalorder %s140, %s141
      %p155 = scmp.eq.s32.totalorder %s25, 1
      %p156 = por %p154, %p155
      %p158 = scmp.ne.s32.totalorder %s141, %s157
      %p159 = scmp.eq.s32.totalorder %s25, 0
      %p160 = por %p158, %p159
      %p161 = scmp.le.s32.totalorder 1, %s19
      %p162 = scmp.lt.s32.totalorder %s19, 3
      %p163 = pnand %p161, %p162
      %p164 = pneg %p163
      // Predicated region
      $region9: #{tpu_custom_call.1} parent=5 // pred_check
        _
      $region10: #{tpu_custom_call.1} parent=5 // pred_check_branch
        %166 = sbr.rel (%p163) target = $region12
      $region11: #{tpu_custom_call.1} parent=5 // pred_region
        %s167 = ssub.s32 %s19, 1
        // Predicated region
        $region13: #{tpu_custom_call.1} parent=11 // pred_check
          %p168 = pneg %p106
        $region14: #{tpu_custom_call.1} parent=11 // pred_check_branch
          %170 = sbr.rel (%p168) target = $region16
        $region15: #{tpu_custom_call.1} parent=11 // pred_region
          %172 = vsyncadd [#allocation9], 0
          %s173 = sshll.u32 %s2, 4
          %s174 = int_to_ptr.hbm [resolvable:$true] %s173
          %s175 = sshll.u32 [#allocation10], 4
          %s176 = int_to_ptr.vmem [resolvable:$true] %s175
          %181 = dma.hbm_to_vmem [thread:$0]  %s174, 2048, %s176, [#allocation9], 128, 128, 8
        $region16: #{tpu_custom_call.1} parent=11 // pred_fallthru
          _
        // Predicated region
        $region17: #{tpu_custom_call.1} parent=11 // pred_check
          %p182 = pneg %p127
        $region18: #{tpu_custom_call.1} parent=11 // pred_check_branch
          %184 = sbr.rel (%p182) target = $region20
        $region19: #{tpu_custom_call.1} parent=11 // pred_region
          _
        $region20: #{tpu_custom_call.1} parent=11 // pred_fallthru
          _
      $region12: #{tpu_custom_call.1} parent=5 // pred_fallthru
        _
      %p185 = scmp.lt.s32.totalorder %s19, 2
      // Predicated region
      $region21: #{tpu_custom_call.1} parent=5 // pred_check
        %p186 = pneg %p185
      $region22: #{tpu_custom_call.1} parent=5 // pred_check_branch
        %188 = sbr.rel (%p186) target = $region24
      $region23: #{tpu_custom_call.1} parent=5 // pred_region
        // Predicated region
        $region25: #{tpu_custom_call.1} parent=23 // pred_check
          %p189 = pneg %p53
        $region26: #{tpu_custom_call.1} parent=23 // pred_check_branch
          %191 = sbr.rel (%p189) target = $region28
        $region27: #{tpu_custom_call.1} parent=23 // pred_region
          %s192 = sand.u32 %s43, 1
          %s193 = scalar_lea.sflag [#allocation6], %s192
          %s194 = sand.u32 %s43, 1
          %s195 = smul.addr %s194, 32
          %s196 = scalar_lea.vmem [#allocation5], %s195
          %s197 = smul.u32 2, %s26
          %s198 = smul.u32 2, %s27
          %200 = vsyncadd %s193, 0
          %s201 = smul.addr %s197, 2
          %s202 = sadd.s32 %s198, %s201
          %s203 = smul.addr %s202, 8
          %s204 = scalar_lea.hbm %s0, %s203
          %s205 = sshll.u32 %s204, 4
          %s206 = int_to_ptr.hbm [resolvable:$true] %s205
          %s207 = sshll.u32 %s196, 4
          %s208 = int_to_ptr.vmem [resolvable:$true] %s207
          %213 = dma.hbm_to_vmem [thread:$0]  %s206, 512, %s208, %s193, 128, 128, 8
        $region28: #{tpu_custom_call.1} parent=23 // pred_fallthru
          _
        // Predicated region
        $region29: #{tpu_custom_call.1} parent=23 // pred_check
          %p214 = pneg %p79
        $region30: #{tpu_custom_call.1} parent=23 // pred_check_branch
          %216 = sbr.rel (%p214) target = $region32
        $region31: #{tpu_custom_call.1} parent=23 // pred_region
          %s217 = sand.u32 %s19, 1
          %s218 = scalar_lea.sflag [#allocation9], %s217
          %s219 = sand.u32 %s69, 1
          %s220 = smul.addr %s219, 16
          %s221 = scalar_lea.vmem [#allocation8], %s220
          %s222 = smul.u32 2, %s26
          %224 = vsyncadd %s218, 0
          %s225 = smul.addr %s222, 8
          %s226 = scalar_lea.hbm %s1, %s225
          %s227 = sshll.u32 %s226, 4
          %s228 = int_to_ptr.hbm [resolvable:$true] %s227
          %s229 = sshll.u32 %s221, 4
          %s230 = int_to_ptr.vmem [resolvable:$true] %s229
          %235 = dma.hbm_to_vmem [thread:$0]  %s228, 256, %s230, %s218, 128, 128, 8
        $region32: #{tpu_custom_call.1} parent=23 // pred_fallthru
          _
      $region24: #{tpu_custom_call.1} parent=5 // pred_fallthru
        _
      %p236 = scmp.le.s32.totalorder 1, %s19
      %p237 = scmp.lt.s32.totalorder %s19, 3
      %p238 = pnand %p236, %p237
      %p239 = pneg %p238
      // Predicated region
      $region33: #{tpu_custom_call.1} parent=5 // pred_check
        _
      $region34: #{tpu_custom_call.1} parent=5 // pred_check_branch
        %241 = sbr.rel (%p238) target = $region36
      $region35: #{tpu_custom_call.1} parent=5 // pred_region
        %s242 = ssub.s32 %s19, 1
        %s243 = sand.u32 %s46, 1
        %s244 = scalar_lea.sflag [#allocation6], %s243
        %s245 = sand.u32 %s46, 1
        %s246 = smul.addr %s245, 32
        %s247 = scalar_lea.vmem [#allocation5], %s246
        // Predicated region
        $region37: #{tpu_custom_call.1} parent=35 // pred_check
          %p248 = pneg %p59
        $region38: #{tpu_custom_call.1} parent=35 // pred_check_branch
          %250 = sbr.rel (%p248) target = $region40
        $region39: #{tpu_custom_call.1} parent=35 // pred_region
          %252 = dma.done %s244, 512
        $region40: #{tpu_custom_call.1} parent=35 // pred_fallthru
          _
        %s253 = sand.u32 %s24, 1
        %s254 = scalar_lea.sflag [#allocation9], %s253
        %s255 = sand.u32 %s72, 1
        %s256 = smul.addr %s255, 16
        %s257 = scalar_lea.vmem [#allocation8], %s256
        // Predicated region
        $region41: #{tpu_custom_call.1} parent=35 // pred_check
          %p258 = pneg %p85
        $region42: #{tpu_custom_call.1} parent=35 // pred_check_branch
          %260 = sbr.rel (%p258) target = $region44
        $region43: #{tpu_custom_call.1} parent=35 // pred_region
          %262 = dma.done %s254, 256
        $region44: #{tpu_custom_call.1} parent=35 // pred_fallthru
          _
        // Predicated region
        $region45: #{tpu_custom_call.1} parent=35 // pred_check
          %p263 = pneg %p106
        $region46: #{tpu_custom_call.1} parent=35 // pred_check_branch
          %265 = sbr.rel (%p263) target = $region48
        $region47: #{tpu_custom_call.1} parent=35 // pred_region
          %267 = dma.done [#allocation9], 2048
        $region48: #{tpu_custom_call.1} parent=35 // pred_fallthru
          _
        %s268 = sand.u32 %s46, 1
        %s269 = scalar_lea.sflag [#allocation6], %s268
        %s270 = sand.u32 %s46, 1
        %s271 = smul.addr %s270, 32
        %s272 = scalar_lea.vmem [#allocation5], %s271
        %p273 = pneg %p59
        %p274 = pneg %p56
        %s275 = sand.u32 %s24, 1
        %s276 = scalar_lea.sflag [#allocation9], %s275
        %s277 = sand.u32 %s72, 1
        %s278 = smul.addr %s277, 16
        %s279 = scalar_lea.vmem [#allocation8], %s278
        %p280 = pneg %p85
        %p281 = pneg %p82
        %p282 = pneg %p106
        %p283 = pneg %p103
        %p284 = pneg %p127
        %p285 = pneg %p124
        %p286 = pneg %p153
        %p287 = pneg %p150
        %s288 = sand.u32 %s140, 1
        %s289 = scalar_lea.sflag [#allocation7], %s288
        %s290 = sand.u32 %s140, 1
        %s291 = smul.addr %s290, 16
        %s292 = scalar_lea.vmem [#allocation11], %s291
        %s293 = smul.u32 2, %s28
        %s294 = smul.u32 2, %s29
        %s295 = smul.u32 2, %s28
        %s296 = smul.u32 2, %s28
        %p297 = scmp.eq.s32.totalorder %s29, 0
        // Predicated region
        $region49: #{tpu_custom_call.1} parent=35 // pred_check
          %p298 = pneg %p297
        $region50: #{tpu_custom_call.1} parent=35 // pred_check_branch
          %300 = sbr.rel (%p298) target = $region52
        $region51: #{tpu_custom_call.1} parent=35 // pred_region
          %vm301 = vcmask 7168
          %302 = vst.msk [vmem:[#allocation2] sm:$0xff] %vm301, -inf
          %303 = vst.msk [vmem:[#allocation2 + $0x8] sm:$0xff] %vm301, -inf
          %304 = vst.msk [vmem:[#allocation3] sm:$0xff] %vm301, 0.0
          %305 = vst.msk [vmem:[#allocation3 + $0x8] sm:$0xff] %vm301, 0.0
          %306 = vst [vmem:[#allocation4] sm:$0xff] 0.0
          %307 = vst [vmem:[#allocation4 + $0x8] sm:$0xff] 0.0
        $region52: #{tpu_custom_call.1} parent=35 // pred_fallthru
          _
        %v308 = vld [vmem:[%s247] sm:$0xff]
        %v309 = vld [vmem:[%s247 + $0x8] sm:$0xff]
        %v310 = vld [vmem:[%s247 + $0x10] sm:$0xff]
        %v311 = vld [vmem:[%s247 + $0x18] sm:$0xff]
        %v312 = vld [vmem:[%s257] sm:$0xff]
        %v313 = vld [vmem:[%s257 + $0x8] sm:$0xff]
        %v314 = vld [vmem:[#allocation10] sm:$0xff]
        %v315 = vld [vmem:[#allocation10 + $0x8] sm:$0xff]
        %v316 = vld [vmem:[#allocation10 + $0x10] sm:$0xff]
        %v317 = vld [vmem:[#allocation10 + $0x18] sm:$0xff]
        %v318 = vld [vmem:[#allocation10 + $0x20] sm:$0xff]
        %v319 = vld [vmem:[#allocation10 + $0x28] sm:$0xff]
        %v320 = vld [vmem:[#allocation10 + $0x30] sm:$0xff]
        %v321 = vld [vmem:[#allocation10 + $0x38] sm:$0xff]
        %v322 = vld [vmem:[#allocation10 + $0x40] sm:$0xff]
        %v323 = vld [vmem:[#allocation10 + $0x48] sm:$0xff]
        %v324 = vld [vmem:[#allocation10 + $0x50] sm:$0xff]
        %v325 = vld [vmem:[#allocation10 + $0x58] sm:$0xff]
        %v326 = vld [vmem:[#allocation10 + $0x60] sm:$0xff]
        %v327 = vld [vmem:[#allocation10 + $0x68] sm:$0xff]
        %v328 = vld [vmem:[#allocation10 + $0x70] sm:$0xff]
        %v329 = vld [vmem:[#allocation10 + $0x78] sm:$0xff]
        %v330 = vld [vmem:[%s3] sm:$0x1]
        %v332 = vperm.slane %v330, 0
        %334 = vmatpush.msra.mxu0 %v329
        %335 = vmatpush.msra.mxu0 %v328
        %336 = vmatpush.msra.mxu0 %v327
        %337 = vmatpush.msra.mxu0 %v326
        %338 = vmatpush.msra.mxu0 %v325
        %339 = vmatpush.msra.mxu0 %v324
        %340 = vmatpush.msra.mxu0 %v323
        %341 = vmatpush.msra.mxu0 %v322
        %342 = vmatpush.msra.mxu0 %v321
        %343 = vmatpush.msra.mxu0 %v320
        %344 = vmatpush.msra.mxu0 %v319
        %345 = vmatpush.msra.mxu0 %v318
        %346 = vmatpush.msra.mxu0 %v317
        %347 = vmatpush.msra.mxu0 %v316
        %348 = vmatpush.msra.mxu0 %v315
        %349 = vmatpush.msra.mxu0 %v314
        %350 = vmatmul.f32.gmra.mxu0 %v308
        %v351 = vpop.f32.mrf.mxu0
        %v352 = vadd.f32 %v332, %v351
        %353 = vmatmul.f32.gmra.mxu0 %v309
        %v354 = vpop.f32.mrf.mxu0
        %v355 = vadd.f32 %v332, %v354
        %356 = vmatmul.f32.gmra.mxu0 %v310
        %v357 = vpop.f32.mrf.mxu0
        %v358 = vadd.f32 %v332, %v357
        %359 = vmatmul.f32.gmra.mxu0 %v311
        %v360 = vpop.f32.mrf.mxu0
        %v361 = vadd.f32 %v332, %v360
        %362 = vdwg.mxu0
        %363 = vmatpush.xpose.msra.mxu0 0.0
        %364 = vmatpush.xpose.msra.mxu0 0.0
        %365 = vmatpush.xpose.msra.mxu0 0.0
        %366 = vmatpush.xpose.msra.mxu0 0.0
        %367 = vmatpush.xpose.msra.mxu0 0.0
        %368 = vmatpush.xpose.msra.mxu0 0.0
        %369 = vmatpush.xpose.msra.mxu0 0.0
        %370 = vmatpush.xpose.msra.mxu0 0.0
        %371 = vmatpush.xpose.msra.mxu0 0.0
        %372 = vmatpush.xpose.msra.mxu0 0.0
        %373 = vmatpush.xpose.msra.mxu0 0.0
        %374 = vmatpush.xpose.msra.mxu0 0.0
        %375 = vmatpush.xpose.msra.mxu0 0.0
        %376 = vmatpush.xpose.msra.mxu0 0.0
        %377 = vmatpush.xpose.msra.mxu0 %v355
        %378 = vmatpush.xpose.msra.mxu0 %v352
        %379 = vmatmul.f32.gmra.mxu0 %v312
        %v380 = vpop.f32.mrf.mxu0
        %v381 = vadd.f32 0.0, %v380
        %382 = vdwg.mxu0
        %383 = vmatpush.xpose.msra.mxu0 0.0
        %384 = vmatpush.xpose.msra.mxu0 0.0
        %385 = vmatpush.xpose.msra.mxu0 0.0
        %386 = vmatpush.xpose.msra.mxu0 0.0
        %387 = vmatpush.xpose.msra.mxu0 0.0
        %388 = vmatpush.xpose.msra.mxu0 0.0
        %389 = vmatpush.xpose.msra.mxu0 0.0
        %390 = vmatpush.xpose.msra.mxu0 0.0
        %391 = vmatpush.xpose.msra.mxu0 0.0
        %392 = vmatpush.xpose.msra.mxu0 0.0
        %393 = vmatpush.xpose.msra.mxu0 0.0
        %394 = vmatpush.xpose.msra.mxu0 0.0
        %395 = vmatpush.xpose.msra.mxu0 0.0
        %396 = vmatpush.xpose.msra.mxu0 0.0
        %397 = vmatpush.xpose.msra.mxu0 %v361
        %398 = vmatpush.xpose.msra.mxu0 %v358
        %399 = vmatmul.f32.gmra.mxu0 %v313
        %v400 = vpop.f32.mrf.mxu0
        %v401 = vadd.f32 0.0, %v400
        %402 = vdwg.mxu0
        %v403 = vld [vmem:[#allocation2] sm:$0xff]
        %v404 = vld [vmem:[#allocation2 + $0x8] sm:$0xff]
        %vm405 = vcmask 130048
        %v406 = vsel %vm405, %v381, -inf
        %407 = vmax.xlane.f32.xlu0 %v406
        %v408 = vpop.xlane.xlu0 %407
        %v409 = vsel %vm405, %v401, -inf
        %410 = vmax.xlane.f32.xlu0 %v409
        %v411 = vpop.xlane.xlu0 %410
        %v412 = vmax.f32 %v403, %v408
        %v413 = vmax.f32 %v404, %v411
        %v414 = vsub.f32 %v403, %v412
        %v415 = vsub.f32 %v404, %v413
        %v416 = vmul.f32 %v414, 1.442695
        %v417 = vpow.pop %v416
        %v418 = vmul.f32 %v415, 1.442695
        %v419 = vpow.pop %v418
        %421 = vset.pattern.permute.xlu0 0
        %422 = vperm.xlu0 %421, %v412
        %v423 = vpop.permute.xlu0 %422
        %426 = vset.pattern.permute.xlu0 0
        %427 = vperm.xlu0 %426, %v413
        %v428 = vpop.permute.xlu0 %427
        %v430 = vsub.f32 %v381, %v423
        %v431 = vsub.f32 %v401, %v428
        %v432 = vmul.f32 %v430, 1.442695
        %v433 = vpow.pop %v432
        %v434 = vmul.f32 %v431, 1.442695
        %v435 = vpow.pop %v434
        %v436 = vld [vmem:[#allocation3] sm:$0xff]
        %v437 = vld [vmem:[#allocation3 + $0x8] sm:$0xff]
        %v438 = vmul.f32 %v417, %v436
        %v439 = vmul.f32 %v419, %v437
        %v440 = vsel %vm405, %v433, 0.0
        %441 = vadd.xlane.f32.xlu0 %v440
        %v442 = vpop.xlane.xlu0 %441
        %v443 = vsel %vm405, %v435, 0.0
        %444 = vadd.xlane.f32.xlu0 %v443
        %v445 = vpop.xlane.xlu0 %444
        %v446 = vadd.f32 %v438, %v442
        %v447 = vadd.f32 %v439, %v445
        %vm448 = vcmask 7168
        %449 = vst.msk [vmem:[#allocation3] sm:$0xff] %vm448, %v446
        %450 = vst.msk [vmem:[#allocation3 + $0x8] sm:$0xff] %vm448, %v447
        %v451 = vld [vmem:[#allocation4] sm:$0xff]
        %v452 = vld [vmem:[#allocation4 + $0x8] sm:$0xff]
        %454 = vset.pattern.permute.xlu0 0
        %455 = vperm.xlu0 %454, %v417
        %v456 = vpop.permute.xlu0 %455
        %459 = vset.pattern.permute.xlu0 0
        %460 = vperm.xlu0 %459, %v419
        %v461 = vpop.permute.xlu0 %460
        %v463 = vmul.f32 %v456, %v451
        %v464 = vmul.f32 %v461, %v452
        %v466 = vsel %vm405, %v433, 0
        %468 = vmatpush.msra.mxu0 0.0
        %469 = vmatpush.msra.mxu0 0.0
        %470 = vmatpush.msra.mxu0 0.0
        %471 = vmatpush.msra.mxu0 0.0
        %472 = vmatpush.msra.mxu0 0.0
        %473 = vmatpush.msra.mxu0 0.0
        %474 = vmatpush.msra.mxu0 0.0
        %475 = vmatpush.msra.mxu0 0.0
        %476 = vmatpush.msra.mxu0 0.0
        %477 = vmatpush.msra.mxu0 0.0
        %478 = vmatpush.msra.mxu0 0.0
        %479 = vmatpush.msra.mxu0 0.0
        %480 = vmatpush.msra.mxu0 0.0
        %481 = vmatpush.msra.mxu0 0.0
        %482 = vmatpush.msra.mxu0 %v309
        %483 = vmatpush.msra.mxu0 %v308
        %484 = vmatmul.f32.gmra.mxu0 %v466
        %v485 = vpop.f32.mrf.mxu0
        %v486 = vadd.f32 0.0, %v485
        %487 = vdwg.mxu0
        %v489 = vsel %vm405, %v435, 0
        %491 = vmatpush.msra.mxu0 0.0
        %492 = vmatpush.msra.mxu0 0.0
        %493 = vmatpush.msra.mxu0 0.0
        %494 = vmatpush.msra.mxu0 0.0
        %495 = vmatpush.msra.mxu0 0.0
        %496 = vmatpush.msra.mxu0 0.0
        %497 = vmatpush.msra.mxu0 0.0
        %498 = vmatpush.msra.mxu0 0.0
        %499 = vmatpush.msra.mxu0 0.0
        %500 = vmatpush.msra.mxu0 0.0
        %501 = vmatpush.msra.mxu0 0.0
        %502 = vmatpush.msra.mxu0 0.0
        %503 = vmatpush.msra.mxu0 0.0
        %504 = vmatpush.msra.mxu0 0.0
        %505 = vmatpush.msra.mxu0 %v311
        %506 = vmatpush.msra.mxu0 %v310
        %507 = vmatmul.f32.gmra.mxu0 %v489
        %v508 = vpop.f32.mrf.mxu0
        %v509 = vadd.f32 0.0, %v508
        %510 = vdwg.mxu0
        %v511 = vadd.f32 %v463, %v486
        %v512 = vadd.f32 %v464, %v509
        %513 = vst [vmem:[#allocation4] sm:$0xff] %v511
        %514 = vst [vmem:[#allocation4 + $0x8] sm:$0xff] %v512
        %515 = vst.msk [vmem:[#allocation2] sm:$0xff] %vm448, %v412
        %516 = vst.msk [vmem:[#allocation2 + $0x8] sm:$0xff] %vm448, %v413
        // Predicated region
        $region53: #{tpu_custom_call.1} parent=35 // pred_check
          %p517 = pneg %p297
        $region54: #{tpu_custom_call.1} parent=35 // pred_check_branch
          %519 = sbr.rel (%p517) target = $region56
        $region55: #{tpu_custom_call.1} parent=35 // pred_region
          %v520 = vld [vmem:[#allocation3] sm:$0xff]
          %v521 = vld [vmem:[#allocation3 + $0x8] sm:$0xff]
          %v522 = vrcp.pop %v520
          %v523 = vmul.f32 %v520, %v522
          %v524 = vsub.f32 1.0, %v523
          %v525 = vmul.f32 %v522, %v524
          %v526 = vadd.f32 %v522, %v525
          %vm527 = vweird.f32 %v520
          %vm528 = vweird.f32 %v522
          %vm529 = vmor %vm527, %vm528
          %v530 = vsel %vm529, %v522, %v526
          %v531 = vand.u32 2147483647, %v520
          %vm532 = vcmp.eq.f32.partialorder %v531, 8.507059e+37
          %v533 = vand.u32 %v520, 2147483648
          %v534 = vor.u32 1.1754944e-38, %v533
          %v535 = vsel %vm532, %v534, %v530
          %v536 = vrcp.pop %v521
          %v537 = vmul.f32 %v521, %v536
          %v538 = vsub.f32 1.0, %v537
          %v539 = vmul.f32 %v536, %v538
          %v540 = vadd.f32 %v536, %v539
          %vm541 = vweird.f32 %v521
          %vm542 = vweird.f32 %v536
          %vm543 = vmor %vm541, %vm542
          %v544 = vsel %vm543, %v536, %v540
          %v545 = vand.u32 2147483647, %v521
          %vm546 = vcmp.eq.f32.partialorder %v545, 8.507059e+37
          %v547 = vand.u32 %v521, 2147483648
          %v548 = vor.u32 1.1754944e-38, %v547
          %v549 = vsel %vm546, %v548, %v544
          %v550 = vld [vmem:[#allocation4] sm:$0xff]
          %v551 = vld [vmem:[#allocation4 + $0x8] sm:$0xff]
          %553 = vset.pattern.permute.xlu0 0
          %554 = vperm.xlu0 %553, %v535
          %v555 = vpop.permute.xlu0 %554
          %558 = vset.pattern.permute.xlu0 0
          %559 = vperm.xlu0 %558, %v549
          %v560 = vpop.permute.xlu0 %559
          %v562 = vmul.f32 %v550, %v555
          %v563 = vmul.f32 %v551, %v560
          %564 = vst [vmem:[%s292] sm:$0xff] %v562
          %565 = vst [vmem:[%s292 + $0x8] sm:$0xff] %v563
        $region56: #{tpu_custom_call.1} parent=35 // pred_fallthru
          _
        %s566 = sand.u32 %s140, 1
        %s567 = scalar_lea.sflag [#allocation7], %s566
        %s568 = sand.u32 %s140, 1
        %s569 = smul.addr %s568, 16
        %s570 = scalar_lea.vmem [#allocation11], %s569
        // Predicated region
        $region57: #{tpu_custom_call.1} parent=35 // pred_check
          %p571 = pneg %p150
        $region58: #{tpu_custom_call.1} parent=35 // pred_check_branch
          %573 = sbr.rel (%p571) target = $region60
        $region59: #{tpu_custom_call.1} parent=35 // pred_region
          %s574 = smul.u32 2, %s28
          %576 = vsyncadd %s567, 0
          %s577 = smul.addr %s574, 8
          %s578 = scalar_lea.hbm %s4, %s577
          %s579 = sshll.u32 %s570, 4
          %s580 = int_to_ptr.vmem [resolvable:$true] %s579
          %s581 = sshll.u32 %s578, 4
          %s582 = int_to_ptr.hbm [resolvable:$true] %s581
          %587 = dma.vmem_to_hbm [thread:$0]  %s580, 256, %s582, %s567, 128, 128, 8
        $region60: #{tpu_custom_call.1} parent=35 // pred_fallthru
          _
      $region36: #{tpu_custom_call.1} parent=5 // pred_fallthru
        _
      %p588 = scmp.le.s32.totalorder 2, %s19
      // Predicated region
      $region61: #{tpu_custom_call.1} parent=5 // pred_check
        %p589 = pneg %p588
      $region62: #{tpu_custom_call.1} parent=5 // pred_check_branch
        %591 = sbr.rel (%p589) target = $region64
      $region63: #{tpu_custom_call.1} parent=5 // pred_region
        %s592 = ssub.s32 %s19, 2
        // Predicated region
        $region65: #{tpu_custom_call.1} parent=63 // pred_check
          %p593 = pneg %p156
        $region66: #{tpu_custom_call.1} parent=63 // pred_check_branch
          %595 = sbr.rel (%p593) target = $region68
        $region67: #{tpu_custom_call.1} parent=63 // pred_region
          %s596 = sand.u32 %s141, 1
          %s597 = scalar_lea.sflag [#allocation7], %s596
          %s598 = sand.u32 %s141, 1
          %s599 = smul.addr %s598, 16
          %s600 = scalar_lea.vmem [#allocation11], %s599
          %602 = dma.done %s597, 256
        $region68: #{tpu_custom_call.1} parent=63 // pred_fallthru
          _
      $region64: #{tpu_custom_call.1} parent=5 // pred_fallthru
        _
    $region6: #{tpu_custom_call.1} parent=1 // loop_footer
      %s23 = sadd.s32 1, %s19
    $region7: #{tpu_custom_call.1} parent=1 // loop_footer_branch
      %18 = sbr.rel target = $region3
    $region8: #{tpu_custom_call.1} parent=1 // loop_exit
      _
    %603 = vsyncpa [#allocation6], 1
    %s604 = scalar_lea.sflag [#allocation6], 1
    %605 = vsyncpa %s604, 1
    %606 = vsyncpa [#allocation9], 1
    %s607 = scalar_lea.sflag [#allocation9], 1
    %608 = vsyncpa %s607, 1
    %609 = vsyncpa [#allocation7], 1
    %s610 = scalar_lea.sflag [#allocation7], 1
    %611 = vsyncpa %s610, 1

// kernel: tpu_custom_call.1
$region0: #{tpu_custom_call.1}
  #allocation0 [shape = 'u32[]', space=smem, size = 0x4, offset = 0x4, fixed_abs, tag = 'smem constant byte address 0x4 - core index']
  #allocation1 [shape = 'u32[72,128]{1,0:T(1,128)}', space=vmem, size = 0x9000, scoped, tag = 'internal scratch']
  #allocation2 [shape = 'f32[2,8,1]{2,1,0:T(8,128)}', space=vmem, size = 0x2000, scoped, tag = 'scratch operand']
  #allocation3 [shape = 'f32[2,8,1]{2,1,0:T(8,128)}', space=vmem, size = 0x2000, scoped, tag = 'scratch operand']
  #allocation4 [shape = 'f32[2,8,128]{2,1,0:T(8,128)}', space=vmem, size = 0x2000, scoped, tag = 'scratch operand']
  %s0 = inlined_call_operand.hbm [shape: f32[4,16,128], index: 0, kind: input, shape index: {}]
  %s1 = inlined_call_operand.hbm [shape: f32[4,8,128], index: 1, kind: input, shape index: {}]
  %s2 = inlined_call_operand.hbm [shape: f32[128,128], index: 2, kind: input, shape index: {}]
  %s3 = inlined_call_operand.vmem [shape: f32[1,128], index: 3, kind: input, shape index: {}]
  %s4 = inlined_call_operand.hbm [shape: f32[4,8,128], index: 4, kind: output, shape index: {}]
  %s5 = sld [smem:[#allocation0]]
  $region69: #{tpu_custom_call.1} parent=0
    _
  %s7 = ssub.s32 1, %s5
  %s8 = scalar_select 0, %s7, %s5
  $region1: #{tpu_custom_call.1} parent=0
    #allocation5 [shape = 'u8[32768]{0}', space=vmem, size = 0x8000, scoped, tag = 'input window, operand 0']
    #allocation6 [shape = 's32[2]{0}', space=sflag, size = 0x8, scoped, tag = 'scoped memory for tpu_custom_call.1']
    #allocation7 [shape = 's32[2]{0}', space=sflag, size = 0x8, scoped, tag = 'scoped memory for tpu_custom_call.1']
    #allocation8 [shape = 'u8[16384]{0}', space=vmem, size = 0x4000, scoped, tag = 'input window, operand 1']
    #allocation9 [shape = 's32[2]{0}', space=sflag, size = 0x8, scoped, tag = 'scoped memory for tpu_custom_call.1']
    #allocation10 [shape = 'u8[65536]{0}', space=vmem, size = 0x10000, scoped, tag = 'input window, operand 2, single buffered']
    #allocation11 [shape = 'u8[16384]{0}', space=vmem, size = 0x4000, scoped, tag = 'output window, operand 0']
    %9 = vsyncpa [#allocation6], 0
    %s10 = scalar_lea.sflag [#allocation6], 1
    %11 = vsyncpa %s10, 0
    %12 = vsyncpa [#allocation9], 0
    %s13 = scalar_lea.sflag [#allocation9], 1
    %14 = vsyncpa %s13, 0
    %15 = vsyncpa [#allocation7], 0
    %s16 = scalar_lea.sflag [#allocation7], 1
    %17 = vsyncpa %s16, 0
    loop: start=0, step=1, limit=4
    $region2: #{tpu_custom_call.1} parent=1 // loop_pre_header
      _
    $region3: #{tpu_custom_call.1} parent=1 // loop_header
      %s19 = sphi 0, %s23
      %p20 = scmp.ge.s32.totalorder %s19, 4
      %s26 = sphi 0, %s38
      %s27 = sphi 0, %s34
      %s28 = sphi 0, %s26
      %s29 = sphi 0, %s27
      %s30 = sphi 0, %s28
      %s31 = sphi 0, %s29
      %s43 = sphi 0, %s45
      %s46 = sphi 0, %s43
      %s47 = sphi 0, %s46
      %s63 = sphi 0, %s47
      %s69 = sphi 0, %s71
      %s72 = sphi 0, %s69
      %s73 = sphi 0, %s72
      %s89 = sphi 0, %s73
      %s93 = sphi 0, %s93
      %s95 = sphi 0, %s93
      %s96 = sphi 0, %s95
      %s110 = sphi 0, %s96
      %s114 = sphi 0, %s114
      %s116 = sphi 0, %s114
      %s117 = sphi 0, %s116
      %s131 = sphi 0, %s117
      %s137 = sphi 0, %s139
      %s140 = sphi 0, %s137
      %s141 = sphi 0, %s140
      %s157 = sphi 0, %s141
    $region4: #{tpu_custom_call.1} parent=1 // loop_header_branch
      %22 = sbr.rel (%p20) target = $region8
    $region5: #{tpu_custom_call.1} parent=1 // loop_body
      %s24 = ssub.s32 %s19, 1
      %s25 = ssub.s32 %s19, 2
      %s32 = sadd.s32 1, %s27
      %p33 = scmp.ge.s32.totalorder %s32, 1
      %s34 = scalar_select %p33, 0, %s32
      %s35 = sadd.s32 1, %s26
      %s36 = scalar_select %p33, %s35, %s26
      %p37 = scmp.ge.s32.totalorder %s36, 2
      %s38 = scalar_select %p37, 0, %s36
      %s39 = ssub.s32 %s26, %s38
      %s40 = ssub.s32 %s27, %s34
      %s41 = sor.u32 %s39, %s40
      %p42 = scmp.eq.s32.totalorder %s41, 0
      %s44 = sadd.s32 %s43, 1
      %s45 = scalar_select %p42, %s43, %s44
      %p48 = pneg %p42
      %p49 = scmp.eq.s32.totalorder %s19, 1
      %p50 = por %p48, %p49
      %p51 = scmp.ne.s32.totalorder %s43, %s46
      %p52 = scmp.eq.s32.totalorder %s19, 0
      %p53 = por %p51, %p52
      %p54 = scmp.ne.s32.totalorder %s43, %s46
      %p55 = scmp.eq.s32.totalorder %s24, 1
      %p56 = por %p54, %p55
      %p57 = scmp.ne.s32.totalorder %s46, %s47
      %p58 = scmp.eq.s32.totalorder %s24, 0
      %p59 = por %p57, %p58
      %p60 = scmp.ne.s32.totalorder %s46, %s47
      %p61 = scmp.eq.s32.totalorder %s25, 1
      %p62 = por %p60, %p61
      %p64 = scmp.ne.s32.totalorder %s47, %s63
      %p65 = scmp.eq.s32.totalorder %s25, 0
      %p66 = por %p64, %p65
      %s67 = ssub.s32 %s26, %s38
      %p68 = scmp.eq.s32.totalorder %s67, 0
      %s70 = sadd.s32 %s69, 1
      %s71 = scalar_select %p68, %s69, %s70
      %p74 = pneg %p68
      %p75 = scmp.eq.s32.totalorder %s19, 1
      %p76 = por %p74, %p75
      %p77 = scmp.ne.s32.totalorder %s69, %s72
      %p78 = scmp.eq.s32.totalorder %s19, 0
      %p79 = por %p77, %p78
      %p80 = scmp.ne.s32.totalorder %s69, %s72
      %p81 = scmp.eq.s32.totalorder %s24, 1
      %p82 = por %p80, %p81
      %p83 = scmp.ne.s32.totalorder %s72, %s73
      %p84 = scmp.eq.s32.totalorder %s24, 0
      %p85 = por %p83, %p84
      %p86 = scmp.ne.s32.totalorder %s72, %s73
      %p87 = scmp.eq.s32.totalorder %s25, 1
      %p88 = por %p86, %p87
      %p90 = scmp.ne.s32.totalorder %s73, %s89
      %p91 = scmp.eq.s32.totalorder %s25, 0
      %p92 = por %p90, %p91
      %s94 = sadd.s32 %s93, 1
      %p97 = scmp.eq.s32.totalorder %s19, 1
      %p98 = scmp.ne.s32.totalorder %s93, %s95
      %p99 = scmp.eq.s32.totalorder %s19, 0
      %p100 = por %p98, %p99
      %p101 = scmp.ne.s32.totalorder %s93, %s95
      %p102 = scmp.eq.s32.totalorder %s24, 1
      %p103 = por %p101, %p102
      %p104 = scmp.ne.s32.totalorder %s95, %s96
      %p105 = scmp.eq.s32.totalorder %s24, 0
      %p106 = por %p104, %p105
      %p107 = scmp.ne.s32.totalorder %s95, %s96
      %p108 = scmp.eq.s32.totalorder %s25, 1
      %p109 = por %p107, %p108
      %p111 = scmp.ne.s32.totalorder %s96, %s110
      %p112 = scmp.eq.s32.totalorder %s25, 0
      %p113 = por %p111, %p112
      %s115 = sadd.s32 %s114, 1
      %p118 = scmp.eq.s32.totalorder %s19, 1
      %p119 = scmp.ne.s32.totalorder %s114, %s116
      %p120 = scmp.eq.s32.totalorder %s19, 0
      %p121 = por %p119, %p120
      %p122 = scmp.ne.s32.totalorder %s114, %s116
      %p123 = scmp.eq.s32.totalorder %s24, 1
      %p124 = por %p122, %p123
      %p125 = scmp.ne.s32.totalorder %s116, %s117
      %p126 = scmp.eq.s32.totalorder %s24, 0
      %p127 = por %p125, %p126
      %p128 = scmp.ne.s32.totalorder %s116, %s117
      %p129 = scmp.eq.s32.totalorder %s25, 1
      %p130 = por %p128, %p129
      %p132 = scmp.ne.s32.totalorder %s117, %s131
      %p133 = scmp.eq.s32.totalorder %s25, 0
      %p134 = por %p132, %p133
      %s135 = ssub.s32 %s26, %s38
      %p136 = scmp.eq.s32.totalorder %s135, 0
      %s138 = sadd.s32 %s137, 1
      %s139 = scalar_select %p136, %s137, %s138
      %p142 = pneg %p136
      %p143 = scmp.eq.s32.totalorder %s19, 1
      %p144 = por %p142, %p143
      %p145 = scmp.ne.s32.totalorder %s137, %s140
      %p146 = scmp.eq.s32.totalorder %s19, 0
      %p147 = por %p145, %p146
      %p148 = scmp.ne.s32.totalorder %s137, %s140
      %p149 = scmp.eq.s32.totalorder %s24, 1
      %p150 = por %p148, %p149
      %p151 = scmp.ne.s32.totalorder %s140, %s141
      %p152 = scmp.eq.s32.totalorder %s24, 0
      %p153 = por %p151, %p152
      %p154 = scmp.ne.s32.totalorder %s140, %s141
      %p155 = scmp.eq.s32.totalorder %s25, 1
      %p156 = por %p154, %p155
      %p158 = scmp.ne.s32.totalorder %s141, %s157
      %p159 = scmp.eq.s32.totalorder %s25, 0
      %p160 = por %p158, %p159
      %p161 = scmp.le.s32.totalorder 1, %s19
      %p162 = scmp.lt.s32.totalorder %s19, 3
      %p163 = pnand %p161, %p162
      %p164 = pneg %p163
      // Predicated region
      $region9: #{tpu_custom_call.1} parent=5 // pred_check
        _
      $region10: #{tpu_custom_call.1} parent=5 // pred_check_branch
        %166 = sbr.rel (%p163) target = $region12
      $region11: #{tpu_custom_call.1} parent=5 // pred_region
        %s167 = ssub.s32 %s19, 1
        // Predicated region
        $region13: #{tpu_custom_call.1} parent=11 // pred_check
          %p168 = pneg %p106
        $region14: #{tpu_custom_call.1} parent=11 // pred_check_branch
          %170 = sbr.rel (%p168) target = $region16
        $region15: #{tpu_custom_call.1} parent=11 // pred_region
          %172 = vsyncadd [#allocation9], 0
          %s173 = sshll.u32 %s2, 4
          %s174 = int_to_ptr.hbm [resolvable:$true] %s173
          %s175 = sshll.u32 [#allocation10], 4
          %s176 = int_to_ptr.vmem [resolvable:$true] %s175
          %181 = dma.hbm_to_vmem [thread:$0]  %s174, 2048, %s176, [#allocation9], 128, 128, 8
        $region16: #{tpu_custom_call.1} parent=11 // pred_fallthru
          _
        // Predicated region
        $region17: #{tpu_custom_call.1} parent=11 // pred_check
          %p182 = pneg %p127
        $region18: #{tpu_custom_call.1} parent=11 // pred_check_branch
          %184 = sbr.rel (%p182) target = $region20
        $region19: #{tpu_custom_call.1} parent=11 // pred_region
          _
        $region20: #{tpu_custom_call.1} parent=11 // pred_fallthru
          _
      $region12: #{tpu_custom_call.1} parent=5 // pred_fallthru
        _
      %p185 = scmp.lt.s32.totalorder %s19, 2
      // Predicated region
      $region21: #{tpu_custom_call.1} parent=5 // pred_check
        %p186 = pneg %p185
      $region22: #{tpu_custom_call.1} parent=5 // pred_check_branch
        %188 = sbr.rel (%p186) target = $region24
      $region23: #{tpu_custom_call.1} parent=5 // pred_region
        // Predicated region
        $region25: #{tpu_custom_call.1} parent=23 // pred_check
          %p189 = pneg %p53
        $region26: #{tpu_custom_call.1} parent=23 // pred_check_branch
          %191 = sbr.rel (%p189) target = $region28
        $region27: #{tpu_custom_call.1} parent=23 // pred_region
          %s192 = sand.u32 %s43, 1
          %s193 = scalar_lea.sflag [#allocation6], %s192
          %s194 = sand.u32 %s43, 1
          %s195 = smul.addr %s194, 32
          %s196 = scalar_lea.vmem [#allocation5], %s195
          %s197 = smul.u32 2, %s26
          %s198 = smul.u32 2, %s27
          %200 = vsyncadd %s193, 0
          %s201 = smul.addr %s197, 2
          %s202 = sadd.s32 %s198, %s201
          %s203 = smul.addr %s202, 8
          %s204 = scalar_lea.hbm %s0, %s203
          %s205 = sshll.u32 %s204, 4
          %s206 = int_to_ptr.hbm [resolvable:$true] %s205
          %s207 = sshll.u32 %s196, 4
          %s208 = int_to_ptr.vmem [resolvable:$true] %s207
          %213 = dma.hbm_to_vmem [thread:$0]  %s206, 512, %s208, %s193, 128, 128, 8
        $region28: #{tpu_custom_call.1} parent=23 // pred_fallthru
          _
        // Predicated region
        $region29: #{tpu_custom_call.1} parent=23 // pred_check
          %p214 = pneg %p79
        $region30: #{tpu_custom_call.1} parent=23 // pred_check_branch
          %216 = sbr.rel (%p214) target = $region32
        $region31: #{tpu_custom_call.1} parent=23 // pred_region
          %s217 = sand.u32 %s19, 1
          %s218 = scalar_lea.sflag [#allocation9], %s217
          %s219 = sand.u32 %s69, 1
          %s220 = smul.addr %s219, 16
          %s221 = scalar_lea.vmem [#allocation8], %s220
          %s222 = smul.u32 2, %s26
          %224 = vsyncadd %s218, 0
          %s225 = smul.addr %s222, 8
          %s226 = scalar_lea.hbm %s1, %s225
          %s227 = sshll.u32 %s226, 4
          %s228 = int_to_ptr.hbm [resolvable:$true] %s227
          %s229 = sshll.u32 %s221, 4
          %s230 = int_to_ptr.vmem [resolvable:$true] %s229
          %235 = dma.hbm_to_vmem [thread:$0]  %s228, 256, %s230, %s218, 128, 128, 8
        $region32: #{tpu_custom_call.1} parent=23 // pred_fallthru
          _
      $region24: #{tpu_custom_call.1} parent=5 // pred_fallthru
        _
      %p236 = scmp.le.s32.totalorder 1, %s19
      %p237 = scmp.lt.s32.totalorder %s19, 3
      %p238 = pnand %p236, %p237
      %p239 = pneg %p238
      // Predicated region
      $region33: #{tpu_custom_call.1} parent=5 // pred_check
        _
      $region34: #{tpu_custom_call.1} parent=5 // pred_check_branch
        %241 = sbr.rel (%p238) target = $region36
      $region35: #{tpu_custom_call.1} parent=5 // pred_region
        %s242 = ssub.s32 %s19, 1
        %s243 = sand.u32 %s46, 1
        %s244 = scalar_lea.sflag [#allocation6], %s243
        %s245 = sand.u32 %s46, 1
        %s246 = smul.addr %s245, 32
        %s247 = scalar_lea.vmem [#allocation5], %s246
        // Predicated region
        $region37: #{tpu_custom_call.1} parent=35 // pred_check
          %p248 = pneg %p59
        $region38: #{tpu_custom_call.1} parent=35 // pred_check_branch
          %250 = sbr.rel (%p248) target = $region40
        $region39: #{tpu_custom_call.1} parent=35 // pred_region
          %252 = dma.done %s244, 512
        $region40: #{tpu_custom_call.1} parent=35 // pred_fallthru
          _
        %s253 = sand.u32 %s24, 1
        %s254 = scalar_lea.sflag [#allocation9], %s253
        %s255 = sand.u32 %s72, 1
        %s256 = smul.addr %s255, 16
        %s257 = scalar_lea.vmem [#allocation8], %s256
        // Predicated region
        $region41: #{tpu_custom_call.1} parent=35 // pred_check
          %p258 = pneg %p85
        $region42: #{tpu_custom_call.1} parent=35 // pred_check_branch
          %260 = sbr.rel (%p258) target = $region44
        $region43: #{tpu_custom_call.1} parent=35 // pred_region
          %262 = dma.done %s254, 256
        $region44: #{tpu_custom_call.1} parent=35 // pred_fallthru
          _
        // Predicated region
        $region45: #{tpu_custom_call.1} parent=35 // pred_check
          %p263 = pneg %p106
        $region46: #{tpu_custom_call.1} parent=35 // pred_check_branch
          %265 = sbr.rel (%p263) target = $region48
        $region47: #{tpu_custom_call.1} parent=35 // pred_region
          %267 = dma.done [#allocation9], 2048
        $region48: #{tpu_custom_call.1} parent=35 // pred_fallthru
          _
        %s268 = sand.u32 %s46, 1
        %s269 = scalar_lea.sflag [#allocation6], %s268
        %s270 = sand.u32 %s46, 1
        %s271 = smul.addr %s270, 32
        %s272 = scalar_lea.vmem [#allocation5], %s271
        %p273 = pneg %p59
        %p274 = pneg %p56
        %s275 = sand.u32 %s24, 1
        %s276 = scalar_lea.sflag [#allocation9], %s275
        %s277 = sand.u32 %s72, 1
        %s278 = smul.addr %s277, 16
        %s279 = scalar_lea.vmem [#allocation8], %s278
        %p280 = pneg %p85
        %p281 = pneg %p82
        %p282 = pneg %p106
        %p283 = pneg %p103
        %p284 = pneg %p127
        %p285 = pneg %p124
        %p286 = pneg %p153
        %p287 = pneg %p150
        %s288 = sand.u32 %s140, 1
        %s289 = scalar_lea.sflag [#allocation7], %s288
        %s290 = sand.u32 %s140, 1
        %s291 = smul.addr %s290, 16
        %s292 = scalar_lea.vmem [#allocation11], %s291
        %s293 = smul.u32 2, %s28
        %s294 = smul.u32 2, %s29
        %s295 = smul.u32 2, %s28
        %s296 = smul.u32 2, %s28
        %p297 = scmp.eq.s32.totalorder %s29, 0
        // Predicated region
        $region49: #{tpu_custom_call.1} parent=35 // pred_check
          %p298 = pneg %p297
        $region50: #{tpu_custom_call.1} parent=35 // pred_check_branch
          %300 = sbr.rel (%p298) target = $region52
        $region51: #{tpu_custom_call.1} parent=35 // pred_region
          %vm301 = vcmask 7168
          %302 = vst.msk [vmem:[#allocation2] sm:$0xff] %vm301, -inf
          %303 = vst.msk [vmem:[#allocation2 + $0x8] sm:$0xff] %vm301, -inf
          %304 = vst.msk [vmem:[#allocation3] sm:$0xff] %vm301, 0.0
          %305 = vst.msk [vmem:[#allocation3 + $0x8] sm:$0xff] %vm301, 0.0
          %306 = vst [vmem:[#allocation4] sm:$0xff] 0.0
          %307 = vst [vmem:[#allocation4 + $0x8] sm:$0xff] 0.0
        $region52: #{tpu_custom_call.1} parent=35 // pred_fallthru
          _
        %v308 = vld [vmem:[%s247] sm:$0xff]
        %v309 = vld [vmem:[%s247 + $0x8] sm:$0xff]
        %v310 = vld [vmem:[%s247 + $0x10] sm:$0xff]
        %v311 = vld [vmem:[%s247 + $0x18] sm:$0xff]
        %v312 = vld [vmem:[%s257] sm:$0xff]
        %v313 = vld [vmem:[%s257 + $0x8] sm:$0xff]
        %v314 = vld [vmem:[#allocation10] sm:$0xff]
        %v315 = vld [vmem:[#allocation10 + $0x8] sm:$0xff]
        %v316 = vld [vmem:[#allocation10 + $0x10] sm:$0xff]
        %v317 = vld [vmem:[#allocation10 + $0x18] sm:$0xff]
        %v318 = vld [vmem:[#allocation10 + $0x20] sm:$0xff]
        %v319 = vld [vmem:[#allocation10 + $0x28] sm:$0xff]
        %v320 = vld [vmem:[#allocation10 + $0x30] sm:$0xff]
        %v321 = vld [vmem:[#allocation10 + $0x38] sm:$0xff]
        %v322 = vld [vmem:[#allocation10 + $0x40] sm:$0xff]
        %v323 = vld [vmem:[#allocation10 + $0x48] sm:$0xff]
        %v324 = vld [vmem:[#allocation10 + $0x50] sm:$0xff]
        %v325 = vld [vmem:[#allocation10 + $0x58] sm:$0xff]
        %v326 = vld [vmem:[#allocation10 + $0x60] sm:$0xff]
        %v327 = vld [vmem:[#allocation10 + $0x68] sm:$0xff]
        %v328 = vld [vmem:[#allocation10 + $0x70] sm:$0xff]
        %v329 = vld [vmem:[#allocation10 + $0x78] sm:$0xff]
        %v330 = vld [vmem:[%s3] sm:$0x1]
        %v332 = vperm.slane %v330, 0
        %334 = vmatpush.msra.mxu0 %v329
        %335 = vmatpush.msra.mxu0 %v328
        %336 = vmatpush.msra.mxu0 %v327
        %337 = vmatpush.msra.mxu0 %v326
        %338 = vmatpush.msra.mxu0 %v325
        %339 = vmatpush.msra.mxu0 %v324
        %340 = vmatpush.msra.mxu0 %v323
        %341 = vmatpush.msra.mxu0 %v322
        %342 = vmatpush.msra.mxu0 %v321
        %343 = vmatpush.msra.mxu0 %v320
        %344 = vmatpush.msra.mxu0 %v319
        %345 = vmatpush.msra.mxu0 %v318
        %346 = vmatpush.msra.mxu0 %v317
        %347 = vmatpush.msra.mxu0 %v316
        %348 = vmatpush.msra.mxu0 %v315
        %349 = vmatpush.msra.mxu0 %v314
        %350 = vmatmul.f32.gmra.mxu0 %v308
        %v351 = vpop.f32.mrf.mxu0
        %v352 = vadd.f32 %v332, %v351
        %353 = vmatmul.f32.gmra.mxu0 %v309
        %v354 = vpop.f32.mrf.mxu0
        %v355 = vadd.f32 %v332, %v354
        %356 = vmatmul.f32.gmra.mxu0 %v310
        %v357 = vpop.f32.mrf.mxu0
        %v358 = vadd.f32 %v332, %v357
        %359 = vmatmul.f32.gmra.mxu0 %v311
        %v360 = vpop.f32.mrf.mxu0
        %v361 = vadd.f32 %v332, %v360
        %362 = vdwg.mxu0
        %363 = vmatpush.xpose.msra.mxu0 0.0
        %364 = vmatpush.xpose.msra.mxu0 0.0
        %365 = vmatpush.xpose.msra.mxu0 0.0
        %366 = vmatpush.xpose.msra.mxu0 0.0
        %367 = vmatpush.xpose.msra.mxu0 0.0
        %368 = vmatpush.xpose.msra.mxu0 0.0
        %369 = vmatpush.xpose.msra.mxu0 0.0
        %370 = vmatpush.xpose.msra.mxu0 0.0
        %371 = vmatpush.xpose.msra.mxu0 0.0
        %372 = vmatpush.xpose.msra.mxu0 0.0
        %373 = vmatpush.xpose.msra.mxu0 0.0
        %374 = vmatpush.xpose.msra.mxu0 0.0
        %375 = vmatpush.xpose.msra.mxu0 0.0
        %376 = vmatpush.xpose.msra.mxu0 0.0
        %377 = vmatpush.xpose.msra.mxu0 %v355
        %378 = vmatpush.xpose.msra.mxu0 %v352
        %379 = vmatmul.f32.gmra.mxu0 %v312
        %v380 = vpop.f32.mrf.mxu0
        %v381 = vadd.f32 0.0, %v380
        %382 = vdwg.mxu0
        %383 = vmatpush.xpose.msra.mxu0 0.0
        %384 = vmatpush.xpose.msra.mxu0 0.0
        %385 = vmatpush.xpose.msra.mxu0 0.0
        %386 = vmatpush.xpose.msra.mxu0 0.0
        %387 = vmatpush.xpose.msra.mxu0 0.0
        %388 = vmatpush.xpose.msra.mxu0 0.0
        %389 = vmatpush.xpose.msra.mxu0 0.0
        %390 = vmatpush.xpose.msra.mxu0 0.0
        %391 = vmatpush.xpose.msra.mxu0 0.0
        %392 = vmatpush.xpose.msra.mxu0 0.0
        %393 = vmatpush.xpose.msra.mxu0 0.0
        %394 = vmatpush.xpose.msra.mxu0 0.0
        %395 = vmatpush.xpose.msra.mxu0 0.0
        %396 = vmatpush.xpose.msra.mxu0 0.0
        %397 = vmatpush.xpose.msra.mxu0 %v361
        %398 = vmatpush.xpose.msra.mxu0 %v358
        %399 = vmatmul.f32.gmra.mxu0 %v313
        %v400 = vpop.f32.mrf.mxu0
        %v401 = vadd.f32 0.0, %v400
        %402 = vdwg.mxu0
        %v403 = vld [vmem:[#allocation2] sm:$0xff]
        %v404 = vld [vmem:[#allocation2 + $0x8] sm:$0xff]
        %vm405 = vcmask 130048
        %v406 = vsel %vm405, %v381, -inf
        %407 = vmax.xlane.f32.xlu0 %v406
        %v408 = vpop.xlane.xlu0 %407
        %v409 = vsel %vm405, %v401, -inf
        %410 = vmax.xlane.f32.xlu0 %v409
        %v411 = vpop.xlane.xlu0 %410
        %v412 = vmax.f32 %v403, %v408
        %v413 = vmax.f32 %v404, %v411
        %v414 = vsub.f32 %v403, %v412
        %v415 = vsub.f32 %v404, %v413
        %v416 = vmul.f32 %v414, 1.442695
        %v417 = vpow.pop %v416
        %v418 = vmul.f32 %v415, 1.442695
        %v419 = vpow.pop %v418
        %421 = vset.pattern.permute.xlu0 0
        %422 = vperm.xlu0 %421, %v412
        %v423 = vpop.permute.xlu0 %422
        %426 = vset.pattern.permute.xlu0 0
        %427 = vperm.xlu0 %426, %v413
        %v428 = vpop.permute.xlu0 %427
        %v430 = vsub.f32 %v381, %v423
        %v431 = vsub.f32 %v401, %v428
        %v432 = vmul.f32 %v430, 1.442695
        %v433 = vpow.pop %v432
        %v434 = vmul.f32 %v431, 1.442695
        %v435 = vpow.pop %v434
        %v436 = vld [vmem:[#allocation3] sm:$0xff]
        %v437 = vld [vmem:[#allocation3 + $0x8] sm:$0xff]
        %v438 = vmul.f32 %v417, %v436
        %v439 = vmul.f32 %v419, %v437
        %v440 = vsel %vm405, %v433, 0.0
        %441 = vadd.xlane.f32.xlu0 %v440
        %v442 = vpop.xlane.xlu0 %441
        %v443 = vsel %vm405, %v435, 0.0
        %444 = vadd.xlane.f32.xlu0 %v443
        %v445 = vpop.xlane.xlu0 %444
        %v446 = vadd.f32 %v438, %v442
        %v447 = vadd.f32 %v439, %v445
        %vm448 = vcmask 7168
        %449 = vst.msk [vmem:[#allocation3] sm:$0xff] %vm448, %v446
        %450 = vst.msk [vmem:[#allocation3 + $0x8] sm:$0xff] %vm448, %v447
        %v451 = vld [vmem:[#allocation4] sm:$0xff]
        %v452 = vld [vmem:[#allocation4 + $0x8] sm:$0xff]
        %454 = vset.pattern.permute.xlu0 0
        %455 = vperm.xlu0 %454, %v417
        %v456 = vpop.permute.xlu0 %455
        %459 = vset.pattern.permute.xlu0 0
        %460 = vperm.xlu0 %459, %v419
        %v461 = vpop.permute.xlu0 %460
        %v463 = vmul.f32 %v456, %v451
        %v464 = vmul.f32 %v461, %v452
        %v466 = vsel %vm405, %v433, 0
        %468 = vmatpush.msra.mxu0 0.0
        %469 = vmatpush.msra.mxu0 0.0
        %470 = vmatpush.msra.mxu0 0.0
        %471 = vmatpush.msra.mxu0 0.0
        %472 = vmatpush.msra.mxu0 0.0
        %473 = vmatpush.msra.mxu0 0.0
        %474 = vmatpush.msra.mxu0 0.0
        %475 = vmatpush.msra.mxu0 0.0
        %476 = vmatpush.msra.mxu0 0.0
        %477 = vmatpush.msra.mxu0 0.0
        %478 = vmatpush.msra.mxu0 0.0
        %479 = vmatpush.msra.mxu0 0.0
        %480 = vmatpush.msra.mxu0 0.0
        %481 = vmatpush.msra.mxu0 0.0
        %482 = vmatpush.msra.mxu0 %v309
        %483 = vmatpush.msra.mxu0 %v308
        %484 = vmatmul.f32.gmra.mxu0 %v466
        %v485 = vpop.f32.mrf.mxu0
        %v486 = vadd.f32 0.0, %v485
        %487 = vdwg.mxu0
        %v489 = vsel %vm405, %v435, 0
        %491 = vmatpush.msra.mxu0 0.0
        %492 = vmatpush.msra.mxu0 0.0
        %493 = vmatpush.msra.mxu0 0.0
        %494 = vmatpush.msra.mxu0 0.0
        %495 = vmatpush.msra.mxu0 0.0
        %496 = vmatpush.msra.mxu0 0.0
        %497 = vmatpush.msra.mxu0 0.0
        %498 = vmatpush.msra.mxu0 0.0
        %499 = vmatpush.msra.mxu0 0.0
        %500 = vmatpush.msra.mxu0 0.0
        %501 = vmatpush.msra.mxu0 0.0
        %502 = vmatpush.msra.mxu0 0.0
        %503 = vmatpush.msra.mxu0 0.0
        %504 = vmatpush.msra.mxu0 0.0
        %505 = vmatpush.msra.mxu0 %v311
        %506 = vmatpush.msra.mxu0 %v310
        %507 = vmatmul.f32.gmra.mxu0 %v489
        %v508 = vpop.f32.mrf.mxu0
        %v509 = vadd.f32 0.0, %v508
        %510 = vdwg.mxu0
        %v511 = vadd.f32 %v463, %v486
        %v512 = vadd.f32 %v464, %v509
        %513 = vst [vmem:[#allocation4] sm:$0xff] %v511
        %514 = vst [vmem:[#allocation4 + $0x8] sm:$0xff] %v512
        %515 = vst.msk [vmem:[#allocation2] sm:$0xff] %vm448, %v412
        %516 = vst.msk [vmem:[#allocation2 + $0x8] sm:$0xff] %vm448, %v413
        // Predicated region
        $region53: #{tpu_custom_call.1} parent=35 // pred_check
          %p517 = pneg %p297
        $region54: #{tpu_custom_call.1} parent=35 // pred_check_branch
          %519 = sbr.rel (%p517) target = $region56
        $region55: #{tpu_custom_call.1} parent=35 // pred_region
          %v520 = vld [vmem:[#allocation3] sm:$0xff]
          %v521 = vld [vmem:[#allocation3 + $0x8] sm:$0xff]
          %v522 = vrcp.pop %v520
          %v523 = vmul.f32 %v520, %v522
          %v524 = vsub.f32 1.0, %v523
          %v525 = vmul.f32 %v522, %v524
          %v526 = vadd.f32 %v522, %v525
          %vm527 = vweird.f32 %v520
          %vm528 = vweird.f32 %v522
          %vm529 = vmor %vm527, %vm528
          %v530 = vsel %vm529, %v522, %v526
          %v531 = vand.u32 2147483647, %v520
          %vm532 = vcmp.eq.f32.partialorder %v531, 8.507059e+37
          %v533 = vand.u32 %v520, 2147483648
          %v534 = vor.u32 1.1754944e-38, %v533
          %v535 = vsel %vm532, %v534, %v530
          %v536 = vrcp.pop %v521
          %v537 = vmul.f32 %v521, %v536
          %v538 = vsub.f32 1.0, %v537
          %v539 = vmul.f32 %v536, %v538
          %v540 = vadd.f32 %v536, %v539
          %vm541 = vweird.f32 %v521
          %vm542 = vweird.f32 %v536
          %vm543 = vmor %vm541, %vm542
          %v544 = vsel %vm543, %v536, %v540
          %v545 = vand.u32 2147483647, %v521
          %vm546 = vcmp.eq.f32.partialorder %v545, 8.507059e+37
          %v547 = vand.u32 %v521, 2147483648
          %v548 = vor.u32 1.1754944e-38, %v547
          %v549 = vsel %vm546, %v548, %v544
          %v550 = vld [vmem:[#allocation4] sm:$0xff]
          %v551 = vld [vmem:[#allocation4 + $0x8] sm:$0xff]
          %553 = vset.pattern.permute.xlu0 0
          %554 = vperm.xlu0 %553, %v535
          %v555 = vpop.permute.xlu0 %554
          %558 = vset.pattern.permute.xlu0 0
          %559 = vperm.xlu0 %558, %v549
          %v560 = vpop.permute.xlu0 %559
          %v562 = vmul.f32 %v550, %v555
          %v563 = vmul.f32 %v551, %v560
          %564 = vst [vmem:[%s292] sm:$0xff] %v562
          %565 = vst [vmem:[%s292 + $0x8] sm:$0xff] %v563
        $region56: #{tpu_custom_call.1} parent=35 // pred_fallthru
          _
        %s566 = sand.u32 %s140, 1
        %s567 = scalar_lea.sflag [#allocation7], %s566
        %s568 = sand.u32 %s140, 1
        %s569 = smul.addr %s568, 16
        %s570 = scalar_lea.vmem [#allocation11], %s569
        // Predicated region
        $region57: #{tpu_custom_call.1} parent=35 // pred_check
          %p571 = pneg %p150
        $region58: #{tpu_custom_call.1} parent=35 // pred_check_branch
          %573 = sbr.rel (%p571) target = $region60
        $region59: #{tpu_custom_call.1} parent=35 // pred_region
          %s574 = smul.u32 2, %s28
          %576 = vsyncadd %s567, 0
          %s577 = smul.addr %s574, 8
          %s578 = scalar_lea.hbm %s4, %s577
          %s579 = sshll.u32 %s570, 4
          %s580 = int_to_ptr.vmem [resolvable:$true] %s579
          %s581 = sshll.u32 %s578, 4
          %s582 = int_to_ptr.hbm [resolvable:$true] %s581
          %587 = dma.vmem_to_hbm [thread:$0]  %s580, 256, %s582, %s567, 128, 128, 8
        $region60: #{tpu_custom_call.1} parent=35 // pred_fallthru
          _
      $region36: #{tpu_custom_call.1} parent=5 // pred_fallthru
        _
      %p588 = scmp.le.s32.totalorder 2, %s19
      // Predicated region
      $region61: #{tpu_custom_call.1} parent=5 // pred_check
        %p589 = pneg %p588
      $region62: #{tpu_custom_call.1} parent=5 // pred_check_branch
        %591 = sbr.rel (%p589) target = $region64
      $region63: #{tpu_custom_call.1} parent=5 // pred_region
        %s592 = ssub.s32 %s19, 2
        // Predicated region
        $region65: #{tpu_custom_call.1} parent=63 // pred_check
          %p593 = pneg %p156
        $region66: #{tpu_custom_call.1} parent=63 // pred_check_branch
          %595 = sbr.rel (%p593) target = $region68
        $region67: #{tpu_custom_call.1} parent=63 // pred_region
          %s596 = sand.u32 %s141, 1
          %s597 = scalar_lea.sflag [#allocation7], %s596
          %s598 = sand.u32 %s141, 1
          %s599 = smul.addr %s598, 16
          %s600 = scalar_lea.vmem [#allocation11], %s599
          %602 = dma.done %s597, 256
        $region68: #{tpu_custom_call.1} parent=63 // pred_fallthru
          _
      $region64: #{tpu_custom_call.1} parent=5 // pred_fallthru
        _
    $region6: #{tpu_custom_call.1} parent=1 // loop_footer
      %s23 = sadd.s32 1, %s19
    $region7: #{tpu_custom_call.1} parent=1 // loop_footer_branch
      %18 = sbr.rel target = $region3
    $region8: #{tpu_custom_call.1} parent=1 // loop_exit
      _
    %603 = vsyncpa [#allocation6], 1
    %s604 = scalar_lea.sflag [#allocation6], 1
    %605 = vsyncpa %s604, 1
    %606 = vsyncpa [#allocation9], 1
    %s607 = scalar_lea.sflag [#allocation9], 1
    %608 = vsyncpa %s607, 1
    %609 = vsyncpa [#allocation7], 1
    %s610 = scalar_lea.sflag [#allocation7], 1
    %611 = vsyncpa %s610, 1

</llo_original>
